<compile_context>
chip_gen: v5e
topology: v5e:2x2
jax: 0.10.0
libtpu: 0.0.40
codegen_flags: <defaults>
</compile_context>

<pallas_src>
import functools

import jax
import jax.numpy as jnp
from jax.experimental import pallas as pl
from jax.experimental.pallas import tpu as pltpu


def _rdb_conv_kernel(x_ref, top_ref, bot_ref, w_ref, b_ref, out_ref, slab_ref,
                     *, k, p, write_passthrough):
    """One (batch, row-tile) grid step.

    x_ref   : (1, T, W, Cin)      centre rows of the tile
    top_ref : (1, p, W, Cin)      p rows just above the tile (garbage at r==0)
    bot_ref : (1, p, W, Cin)      p rows just below the tile (garbage at last r)
    w_ref   : (k*k, Cin, G)       tap-major weight
    b_ref   : (1, G)              bias (f32)
    out_ref : (1, T, W, Cin+G)    (or (1, T, W, G) when write_passthrough=False)
    slab_ref: (T+2p, W+2p, Cin)   VMEM scratch: zero-padded input slab
    """
    _, T, W, Cin = x_ref.shape
    G = w_ref.shape[-1]
    Wp = W + 2 * p
    r = pl.program_id(1)
    last_r = pl.num_programs(1) - 1

    # --- build the zero-padded slab in VMEM (replaces wrapper-side jnp.pad) --
    # TODO(synk): DMA the centre rows straight from HBM into slab_ref
    # (memory_space=pl.ANY + make_async_copy) to skip this VMEM->VMEM pass.
    slab_ref[p:p + T, p:p + W, :] = x_ref[0]
    slab_ref[0:p, p:p + W, :] = top_ref[0]
    slab_ref[p + T:p + T + p, p:p + W, :] = bot_ref[0]
    zcol = jnp.zeros((T + 2 * p, p, Cin), dtype=slab_ref.dtype)
    slab_ref[:, 0:p, :] = zcol                        # left zero border
    slab_ref[:, p + W:p + W + p, :] = zcol            # right zero border
    zrow = jnp.zeros((p, Wp, Cin), dtype=slab_ref.dtype)

    @pl.when(r == 0)
    def _():                                          # top image border
        slab_ref[0:p, :, :] = zrow

    @pl.when(r == last_r)
    def _():                                          # bottom image border
        slab_ref[p + T:p + T + p, :, :] = zrow

    # --- conv: k*k accumulating MXU matmuls (no im2col temporary) -----------
    if Cin % 128 == 0:
        # Lane-tile aligned concat offsets -> one big K = k*k*Cin matmul.
        taps = [slab_ref[kh:kh + T, kw:kw + W, :].reshape(T * W, Cin)
                for kh in range(k) for kw in range(k)]
        patches = jnp.concatenate(taps, axis=-1)
        acc = jnp.dot(patches, w_ref[...].reshape(k * k * Cin, G),
                      preferred_element_type=jnp.float32)
    else:
        acc = jnp.zeros((T * W, G), dtype=jnp.float32)
        t = 0
        for kh in range(k):
            for kw in range(k):
                tap = slab_ref[kh:kh + T, kw:kw + W, :].reshape(T * W, Cin)
                acc = acc + jnp.dot(tap, w_ref[t],
                                    preferred_element_type=jnp.float32)
                t += 1

    acc = jnp.maximum(acc + b_ref[...], 0.0)          # bias + ReLU, once, f32
    conv = acc.reshape(T, W, G).astype(out_ref.dtype)

    if write_passthrough:
        # torch.cat((x, out), channel) as two direct slice stores.
        out_ref[0, :, :, 0:Cin] = x_ref[0]
        out_ref[0, :, :, Cin:Cin + G] = conv
    else:
        out_ref[0] = conv                             # lane-dense G-wide store


def _vmem_capacity_bytes():
    """Per-core VMEM capacity; conservative v7x default if the query fails."""
    try:
        cap = getattr(pltpu.get_tpu_info(), "vmem_capacity_bytes", None)
        if cap:
            return int(cap)
    except Exception:
        pass
    return 64 * 1024 * 1024


def _step_vmem_bytes(t, W, Cin, G, out_c, itemsize, p, k):
    """Per-grid-step VMEM footprint (same formula for picker and limit)."""
    blk_in = 2 * (t * W * Cin + 2 * p * W * Cin) * itemsize   # dbl-buffered in
    blk_out = 2 * t * W * out_c * itemsize                    # dbl-buffered out
    wts = k * k * Cin * G * itemsize + 4 * G                  # weights + bias
    slab = (t + 2 * p) * (W + 2 * p) * Cin * itemsize         # padded slab
    tmps = t * W * G * 4 + t * W * Cin * max(itemsize, 4)     # f32 acc + a tap
    return blk_in + blk_out + wts + slab + tmps


def _pick_tile_h(H, W, Cin, G, out_c, itemsize, p, k, budget):
    """Largest multiple-of-8 divisor of H whose per-step footprint fits."""
    cands = [t for t in range(p, H + 1, p)
             if H % t == 0 and (t % 8 == 0 or t == H)]
    best = min(cands)
    for t in sorted(cands):
        if _step_vmem_bytes(t, W, Cin, G, out_c, itemsize, p, k) <= budget:
            best = t
    return best


def prepare_rdb_conv_weight(weight_oihw, dtype):
    """OIHW conv weight -> (k*k, Cin, G) tap-major weight (do once per layer)."""
    G, Cin, kh, kw = weight_oihw.shape
    w = jnp.transpose(weight_oihw, (2, 3, 1, 0)).reshape(kh * kw, Cin, G)
    return w.astype(dtype)


def rdb_conv_nhwc(x_nhwc, weight, bias, kSize=3, tile_h=None, concat=True):
    """RDB_Conv forward in NHWC.

    concat=True  -> cat([x, relu(conv(x)+b)], channel)   (PyTorch parity)
    concat=False -> only relu(conv(x)+b), lane-dense G-channel output; RDB
                    stacks that maintain their own growing buffer should use
                    this and alias it in (input_output_aliases) to avoid the
                    x pass-through on the HBM write path.
    `weight` may be raw OIHW (G,Cin,k,k) or pre-prepared (k*k,Cin,G).
    """
    N, H, W, Cin = x_nhwc.shape
    assert kSize % 2 == 1 and kSize >= 3
    p = (kSize - 1) // 2
    dt = x_nhwc.dtype
    itemsize = jnp.dtype(dt).itemsize

    if weight.ndim == 4:
        weight = prepare_rdb_conv_weight(weight, dt)
    assert weight.ndim == 3 and weight.shape[:2] == (kSize * kSize, Cin)
    w = weight.astype(dt)
    G = w.shape[-1]
    b2 = bias.reshape(1, G).astype(jnp.float32)
    out_c = Cin + G if concat else G

    cap = _vmem_capacity_bytes()
    budget = max(4 * 1024 * 1024, cap // 4)          # per-step block budget
    if tile_h is None:
        tile_h = _pick_tile_h(H, W, Cin, G, out_c, itemsize, p, kSize, budget)
    assert H % tile_h == 0, (H, tile_h)
    assert tile_h % p == 0 and H % p == 0, (tile_h, H, p)
    num_r = H // tile_h
    th_blk = tile_h // p          # row-tile extent in halo-block units
    h_blk = H // p                # image extent in halo-block units
    # NOTE(v7x): with N*num_r odd one of the two TensorCores idles on the tail
    # step; prefer shapes/tiles that give an even parallel extent.

    est = _step_vmem_bytes(tile_h, W, Cin, G, out_c, itemsize, p, kSize)
    vmem_limit = int(min(max(2 * est, 32 * 1024 * 1024), (cap * 3) // 4))

    kernel = functools.partial(_rdb_conv_kernel, k=kSize, p=p,
                               write_passthrough=concat)
    return pl.pallas_call(
        kernel,
        out_shape=jax.ShapeDtypeStruct((N, H, W, out_c), dt),
        grid=(N, num_r),
        in_specs=[
            # centre rows of the tile (bulk of the input, read exactly once)
            pl.BlockSpec((1, tile_h, W, Cin), lambda n, r: (n, r, 0, 0)),
            # p-row halos just above / below the tile (clamped at the image
            # borders; the kernel zeroes them there under pl.when)
            pl.BlockSpec((1, p, W, Cin),
                         lambda n, r: (n, jnp.maximum(r * th_blk - 1, 0), 0, 0)),
            pl.BlockSpec((1, p, W, Cin),
                         lambda n, r: (n, jnp.minimum((r + 1) * th_blk,
                                                      h_blk - 1), 0, 0)),
            pl.BlockSpec((kSize * kSize, Cin, G), lambda n, r: (0, 0, 0)),
            pl.BlockSpec((1, G), lambda n, r: (0, 0)),
        ],
        out_specs=pl.BlockSpec((1, tile_h, W, out_c), lambda n, r: (n, r, 0, 0)),
        scratch_shapes=[pltpu.VMEM((tile_h + 2 * p, W + 2 * p, Cin), dt)],
        compiler_params=pltpu.CompilerParams(
            dimension_semantics=("parallel", "parallel"),
            vmem_limit_bytes=vmem_limit,
        ),
    )(x_nhwc, x_nhwc, x_nhwc, w, b2)


def rdb_conv(x_nchw, weight_oihw, bias, kSize=3, tile_h=None):
    """PyTorch-parity wrapper (NCHW in / NCHW out).

    The NCHW<->NHWC transposes live only here; inside an RDB stack call
    `rdb_conv_nhwc` directly (with pre-prepared weights and concat=False) and
    keep NHWC end-to-end to avoid the extra HBM round trips.
    """
    x = jnp.transpose(x_nchw, (0, 2, 3, 1))
    out = rdb_conv_nhwc(x, weight_oihw, bias, kSize=kSize, tile_h=tile_h)
    return jnp.transpose(out, (0, 3, 1, 2))


def _reference(x_nchw, weight_oihw, bias):
    """Pure-JAX reference (lax conv) for correctness checking."""
    out = jax.lax.conv_general_dilated(
        x_nchw, weight_oihw,
        window_strides=(1, 1), padding="SAME",
        dimension_numbers=("NCHW", "OIHW", "NCHW"),
    ) + bias.reshape(1, -1, 1, 1)
    out = jnp.maximum(out, 0.0)
    return jnp.concatenate([x_nchw, out], axis=1)


if __name__ == "__main__":
    # Small deterministic setup: N=2, Cin=4, H=W=16, growRate G=8, kSize=3.
    key = jax.random.PRNGKey(0)
    k_x, k_w, k_b = jax.random.split(key, 3)

    N, Cin, H, W = 2, 4, 16, 16
    G, kSize = 8, 3

    x = jax.random.normal(k_x, (N, Cin, H, W), dtype=jnp.float32)
    fan_in = Cin * kSize * kSize
    weight = jax.random.normal(k_w, (G, Cin, kSize, kSize), dtype=jnp.float32)
    weight = weight * (1.0 / jnp.sqrt(fan_in))
    bias = jax.random.normal(k_b, (G,), dtype=jnp.float32) * 0.01

    ref = jax.block_until_ready(_reference(x, weight, bias))

    # f32 path, tile_h=8 -> grid (2, 2): exercises row tiling + halo/border code.
    out = jax.block_until_ready(rdb_conv(x, weight, bias, kSize=kSize, tile_h=8))
    assert out.shape == (N, Cin + G, H, W), out.shape
    assert out.dtype == jnp.float32
    err = float(jnp.max(jnp.abs(out - ref)))
    assert err < 1e-4, err

    # bf16 path (halved HBM bytes / doubled MXU rate; f32 accumulate inside).
    out_bf16 = jax.block_until_ready(
        rdb_conv(x.astype(jnp.bfloat16), weight.astype(jnp.bfloat16), bias,
                 kSize=kSize, tile_h=8))
    assert out_bf16.dtype == jnp.bfloat16
    err_bf16 = float(jnp.max(jnp.abs(out_bf16.astype(jnp.float32) - ref)))
    assert err_bf16 < 0.25, err_bf16

    # conv-only path (lane-dense G-channel output, auto-picked tile -> num_r=1).
    x_nhwc = jnp.transpose(x, (0, 2, 3, 1))
    w_prep = prepare_rdb_conv_weight(weight, jnp.float32)
    conv_only = jax.block_until_ready(
        rdb_conv_nhwc(x_nhwc, w_prep, bias, kSize=kSize, concat=False))
    ref_conv = jnp.transpose(ref[:, Cin:, :, :], (0, 2, 3, 1))
    assert conv_only.shape == (N, H, W, G), conv_only.shape
    err_conv = float(jnp.max(jnp.abs(conv_only - ref_conv)))
    assert err_conv < 1e-4, err_conv

    print("KERNEL_OK")
</pallas_src>

<mosaic_0001>
module attributes {stable_mosaic.version = 11 : i64} {
  func.func @_rdb_conv_kernel(%arg0: i32, %arg1: i32, %arg2: memref<1x8x16x4xf32, #tpu.memory_space<vmem>>, %arg3: memref<1x1x16x4xf32, #tpu.memory_space<vmem>>, %arg4: memref<1x1x16x4xf32, #tpu.memory_space<vmem>>, %arg5: memref<9x4x8xf32, #tpu.memory_space<vmem>>, %arg6: memref<1x8xf32, #tpu.memory_space<vmem>>, %arg7: memref<1x8x16x12xf32, #tpu.memory_space<vmem>>, %arg8: memref<10x18x4xf32, #tpu.memory_space<vmem>>) attributes {dimension_semantics = [#tpu.dimension_semantics<parallel>, #tpu.dimension_semantics<parallel>], iteration_bounds = array<i64: 2, 2>, scalar_prefetch = 0 : i64, scratch_operands = 1 : i64, tpu.core_type = #tpu.core_type<tc>, window_params = [{transform_indices = @transform_0, window_bounds = array<i64: 1, 8, 16, 4>}, {transform_indices = @transform_1, window_bounds = array<i64: 1, 1, 16, 4>}, {transform_indices = @transform_2, window_bounds = array<i64: 1, 1, 16, 4>}, {pipeline_mode = #tpu.pipeline_mode<synchronous>, transform_indices = @transform_3, window_bounds = array<i64: 9, 4, 8>}, {pipeline_mode = #tpu.pipeline_mode<synchronous>, transform_indices = @transform_4, window_bounds = array<i64: 1, 8>}, {transform_indices = @transform_5, window_bounds = array<i64: 1, 8, 16, 12>}]} {
    %c0 = arith.constant 0 : index
    %c0_0 = arith.constant 0 : index
    %c0_1 = arith.constant 0 : index
    %c0_2 = arith.constant 0 : index
    %0 = vector.load %arg2[%c0, %c0_0, %c0_1, %c0_2] : memref<1x8x16x4xf32, #tpu.memory_space<vmem>>, vector<1x8x16x4xf32>
    %1 = vector.shape_cast %0 : vector<1x8x16x4xf32> to vector<8x16x4xf32>
    %c1 = arith.constant 1 : index
    %c1_3 = arith.constant 1 : index
    %c0_4 = arith.constant 0 : index
    %2 = vector.load %arg8[%c1, %c1_3, %c0_4] : memref<10x18x4xf32, #tpu.memory_space<vmem>>, vector<8x16x4xf32>
    tpu.vector_store %arg8[%c1, %c1_3, %c0_4], %1 {strides = array<i32>} : memref<10x18x4xf32, #tpu.memory_space<vmem>>, vector<8x16x4xf32>,
    %c0_5 = arith.constant 0 : index
    %c0_6 = arith.constant 0 : index
    %c0_7 = arith.constant 0 : index
    %c0_8 = arith.constant 0 : index
    %3 = vector.load %arg3[%c0_5, %c0_6, %c0_7, %c0_8] : memref<1x1x16x4xf32, #tpu.memory_space<vmem>>, vector<1x1x16x4xf32>
    %4 = vector.shape_cast %3 : vector<1x1x16x4xf32> to vector<1x16x4xf32>
    %c0_9 = arith.constant 0 : index
    %c1_10 = arith.constant 1 : index
    %c0_11 = arith.constant 0 : index
    %5 = vector.load %arg8[%c0_9, %c1_10, %c0_11] : memref<10x18x4xf32, #tpu.memory_space<vmem>>, vector<1x16x4xf32>
    tpu.vector_store %arg8[%c0_9, %c1_10, %c0_11], %4 {strides = array<i32>} : memref<10x18x4xf32, #tpu.memory_space<vmem>>, vector<1x16x4xf32>,
    %c0_12 = arith.constant 0 : index
    %c0_13 = arith.constant 0 : index
    %c0_14 = arith.constant 0 : index
    %c0_15 = arith.constant 0 : index
    %6 = vector.load %arg4[%c0_12, %c0_13, %c0_14, %c0_15] : memref<1x1x16x4xf32, #tpu.memory_space<vmem>>, vector<1x1x16x4xf32>
    %7 = vector.shape_cast %6 : vector<1x1x16x4xf32> to vector<1x16x4xf32>
    %c9 = arith.constant 9 : index
    %c1_16 = arith.constant 1 : index
    %c0_17 = arith.constant 0 : index
    %8 = vector.load %arg8[%c9, %c1_16, %c0_17] : memref<10x18x4xf32, #tpu.memory_space<vmem>>, vector<1x16x4xf32>
    tpu.vector_store %arg8[%c9, %c1_16, %c0_17], %7 {strides = array<i32>} : memref<10x18x4xf32, #tpu.memory_space<vmem>>, vector<1x16x4xf32>,
    %cst = arith.constant 0.000000e+00 : f32
    %9 = vector.broadcast %cst : f32 to vector<10x1x4xf32>
    %c0_18 = arith.constant 0 : index
    %c0_19 = arith.constant 0 : index
    %c0_20 = arith.constant 0 : index
    %10 = vector.load %arg8[%c0_18, %c0_19, %c0_20] : memref<10x18x4xf32, #tpu.memory_space<vmem>>, vector<10x1x4xf32>
    tpu.vector_store %arg8[%c0_18, %c0_19, %c0_20], %9 {strides = array<i32>} : memref<10x18x4xf32, #tpu.memory_space<vmem>>, vector<10x1x4xf32>,
    %c0_21 = arith.constant 0 : index
    %c17 = arith.constant 17 : index
    %c0_22 = arith.constant 0 : index
    %11 = vector.load %arg8[%c0_21, %c17, %c0_22] : memref<10x18x4xf32, #tpu.memory_space<vmem>>, vector<10x1x4xf32>
    tpu.vector_store %arg8[%c0_21, %c17, %c0_22], %9 {strides = array<i32>} : memref<10x18x4xf32, #tpu.memory_space<vmem>>, vector<10x1x4xf32>,
    %cst_23 = arith.constant 0.000000e+00 : f32
    %12 = vector.broadcast %cst_23 : f32 to vector<1x18x4xf32>
    %c0_i32 = arith.constant 0 : i32
    %13 = arith.cmpi eq, %arg1, %c0_i32 : i32
    %14 = arith.extui %13 : i1 to i32
    %c0_i32_24 = arith.constant 0 : i32
    %15 = arith.cmpi ne, %14, %c0_i32_24 : i32
    scf.if %15 {
      %c0_98 = arith.constant 0 : index
      %c0_99 = arith.constant 0 : index
      %c0_100 = arith.constant 0 : index
      %88 = vector.load %arg8[%c0_98, %c0_99, %c0_100] : memref<10x18x4xf32, #tpu.memory_space<vmem>>, vector<1x18x4xf32>
      tpu.vector_store %arg8[%c0_98, %c0_99, %c0_100], %12 {strides = array<i32>} : memref<10x18x4xf32, #tpu.memory_space<vmem>>, vector<1x18x4xf32>,
    } else {
    }
    %c1_i32 = arith.constant 1 : i32
    %16 = arith.cmpi eq, %arg1, %c1_i32 : i32
    %17 = arith.extui %16 : i1 to i32
    %c0_i32_25 = arith.constant 0 : i32
    %18 = arith.cmpi ne, %17, %c0_i32_25 : i32
    scf.if %18 {
      %c9_98 = arith.constant 9 : index
      %c0_99 = arith.constant 0 : index
      %c0_100 = arith.constant 0 : index
      %88 = vector.load %arg8[%c9_98, %c0_99, %c0_100] : memref<10x18x4xf32, #tpu.memory_space<vmem>>, vector<1x18x4xf32>
      tpu.vector_store %arg8[%c9_98, %c0_99, %c0_100], %12 {strides = array<i32>} : memref<10x18x4xf32, #tpu.memory_space<vmem>>, vector<1x18x4xf32>,
    } else {
    }
    %cst_26 = arith.constant 0.000000e+00 : f32
    %19 = vector.broadcast %cst_26 : f32 to vector<128x8xf32>
    %c0_27 = arith.constant 0 : index
    %c0_28 = arith.constant 0 : index
    %c0_29 = arith.constant 0 : index
    %20 = vector.load %arg8[%c0_27, %c0_28, %c0_29] : memref<10x18x4xf32, #tpu.memory_space<vmem>>, vector<8x16x4xf32>
    %21 = vector.shape_cast %20 : vector<8x16x4xf32> to vector<128x4xf32>
    %c0_30 = arith.constant 0 : index
    %c0_31 = arith.constant 0 : index
    %c0_32 = arith.constant 0 : index
    %22 = vector.load %arg5[%c0_30, %c0_31, %c0_32] : memref<9x4x8xf32, #tpu.memory_space<vmem>>, vector<1x4x8xf32>
    %23 = vector.shape_cast %22 : vector<1x4x8xf32> to vector<4x8xf32>
    %cst_33 = arith.constant dense<0.000000e+00> : vector<128x8xf32>
    %24 = tpu.matmul %21, %23, %cst_33 {dimension_numbers = #tpu.dot_dimension_numbers<[1], [0], [0], [1], [0, 0, 1, 1], [], []>} : vector<128x4xf32>, vector<4x8xf32>, vector<128x8xf32> -> vector<128x8xf32>
    %25 = arith.addf %19, %24 : vector<128x8xf32>
    %c0_34 = arith.constant 0 : index
    %c1_35 = arith.constant 1 : index
    %c0_36 = arith.constant 0 : index
    %26 = vector.load %arg8[%c0_34, %c1_35, %c0_36] : memref<10x18x4xf32, #tpu.memory_space<vmem>>, vector<8x16x4xf32>
    %27 = vector.shape_cast %26 : vector<8x16x4xf32> to vector<128x4xf32>
    %c1_37 = arith.constant 1 : index
    %c0_38 = arith.constant 0 : index
    %c0_39 = arith.constant 0 : index
    %28 = vector.load %arg5[%c1_37, %c0_38, %c0_39] : memref<9x4x8xf32, #tpu.memory_space<vmem>>, vector<1x4x8xf32>
    %29 = vector.shape_cast %28 : vector<1x4x8xf32> to vector<4x8xf32>
    %cst_40 = arith.constant dense<0.000000e+00> : vector<128x8xf32>
    %30 = tpu.matmul %27, %29, %cst_40 {dimension_numbers = #tpu.dot_dimension_numbers<[1], [0], [0], [1], [0, 0, 1, 1], [], []>} : vector<128x4xf32>, vector<4x8xf32>, vector<128x8xf32> -> vector<128x8xf32>
    %31 = arith.addf %25, %30 : vector<128x8xf32>
    %c0_41 = arith.constant 0 : index
    %c2 = arith.constant 2 : index
    %c0_42 = arith.constant 0 : index
    %32 = vector.load %arg8[%c0_41, %c2, %c0_42] : memref<10x18x4xf32, #tpu.memory_space<vmem>>, vector<8x16x4xf32>
    %33 = vector.shape_cast %32 : vector<8x16x4xf32> to vector<128x4xf32>
    %c2_43 = arith.constant 2 : index
    %c0_44 = arith.constant 0 : index
    %c0_45 = arith.constant 0 : index
    %34 = vector.load %arg5[%c2_43, %c0_44, %c0_45] : memref<9x4x8xf32, #tpu.memory_space<vmem>>, vector<1x4x8xf32>
    %35 = vector.shape_cast %34 : vector<1x4x8xf32> to vector<4x8xf32>
    %cst_46 = arith.constant dense<0.000000e+00> : vector<128x8xf32>
    %36 = tpu.matmul %33, %35, %cst_46 {dimension_numbers = #tpu.dot_dimension_numbers<[1], [0], [0], [1], [0, 0, 1, 1], [], []>} : vector<128x4xf32>, vector<4x8xf32>, vector<128x8xf32> -> vector<128x8xf32>
    %37 = arith.addf %31, %36 : vector<128x8xf32>
    %c1_47 = arith.constant 1 : index
    %c0_48 = arith.constant 0 : index
    %c0_49 = arith.constant 0 : index
    %38 = vector.load %arg8[%c1_47, %c0_48, %c0_49] : memref<10x18x4xf32, #tpu.memory_space<vmem>>, vector<8x16x4xf32>
    %39 = vector.shape_cast %38 : vector<8x16x4xf32> to vector<128x4xf32>
    %c3 = arith.constant 3 : index
    %c0_50 = arith.constant 0 : index
    %c0_51 = arith.constant 0 : index
    %40 = vector.load %arg5[%c3, %c0_50, %c0_51] : memref<9x4x8xf32, #tpu.memory_space<vmem>>, vector<1x4x8xf32>
    %41 = vector.shape_cast %40 : vector<1x4x8xf32> to vector<4x8xf32>
    %cst_52 = arith.constant dense<0.000000e+00> : vector<128x8xf32>
    %42 = tpu.matmul %39, %41, %cst_52 {dimension_numbers = #tpu.dot_dimension_numbers<[1], [0], [0], [1], [0, 0, 1, 1], [], []>} : vector<128x4xf32>, vector<4x8xf32>, vector<128x8xf32> -> vector<128x8xf32>
    %43 = arith.addf %37, %42 : vector<128x8xf32>
    %c1_53 = arith.constant 1 : index
    %c1_54 = arith.constant 1 : index
    %c0_55 = arith.constant 0 : index
    %44 = vector.load %arg8[%c1_53, %c1_54, %c0_55] : memref<10x18x4xf32, #tpu.memory_space<vmem>>, vector<8x16x4xf32>
    %45 = vector.shape_cast %44 : vector<8x16x4xf32> to vector<128x4xf32>
    %c4 = arith.constant 4 : index
    %c0_56 = arith.constant 0 : index
    %c0_57 = arith.constant 0 : index
    %46 = vector.load %arg5[%c4, %c0_56, %c0_57] : memref<9x4x8xf32, #tpu.memory_space<vmem>>, vector<1x4x8xf32>
    %47 = vector.shape_cast %46 : vector<1x4x8xf32> to vector<4x8xf32>
    %cst_58 = arith.constant dense<0.000000e+00> : vector<128x8xf32>
    %48 = tpu.matmul %45, %47, %cst_58 {dimension_numbers = #tpu.dot_dimension_numbers<[1], [0], [0], [1], [0, 0, 1, 1], [], []>} : vector<128x4xf32>, vector<4x8xf32>, vector<128x8xf32> -> vector<128x8xf32>
    %49 = arith.addf %43, %48 : vector<128x8xf32>
    %c1_59 = arith.constant 1 : index
    %c2_60 = arith.constant 2 : index
    %c0_61 = arith.constant 0 : index
    %50 = vector.load %arg8[%c1_59, %c2_60, %c0_61] : memref<10x18x4xf32, #tpu.memory_space<vmem>>, vector<8x16x4xf32>
    %51 = vector.shape_cast %50 : vector<8x16x4xf32> to vector<128x4xf32>
    %c5 = arith.constant 5 : index
    %c0_62 = arith.constant 0 : index
    %c0_63 = arith.constant 0 : index
    %52 = vector.load %arg5[%c5, %c0_62, %c0_63] : memref<9x4x8xf32, #tpu.memory_space<vmem>>, vector<1x4x8xf32>
    %53 = vector.shape_cast %52 : vector<1x4x8xf32> to vector<4x8xf32>
    %cst_64 = arith.constant dense<0.000000e+00> : vector<128x8xf32>
    %54 = tpu.matmul %51, %53, %cst_64 {dimension_numbers = #tpu.dot_dimension_numbers<[1], [0], [0], [1], [0, 0, 1, 1], [], []>} : vector<128x4xf32>, vector<4x8xf32>, vector<128x8xf32> -> vector<128x8xf32>
    %55 = arith.addf %49, %54 : vector<128x8xf32>
    %c2_65 = arith.constant 2 : index
    %c0_66 = arith.constant 0 : index
    %c0_67 = arith.constant 0 : index
    %56 = vector.load %arg8[%c2_65, %c0_66, %c0_67] : memref<10x18x4xf32, #tpu.memory_space<vmem>>, vector<8x16x4xf32>
    %57 = vector.shape_cast %56 : vector<8x16x4xf32> to vector<128x4xf32>
    %c6 = arith.constant 6 : index
    %c0_68 = arith.constant 0 : index
    %c0_69 = arith.constant 0 : index
    %58 = vector.load %arg5[%c6, %c0_68, %c0_69] : memref<9x4x8xf32, #tpu.memory_space<vmem>>, vector<1x4x8xf32>
    %59 = vector.shape_cast %58 : vector<1x4x8xf32> to vector<4x8xf32>
    %cst_70 = arith.constant dense<0.000000e+00> : vector<128x8xf32>
    %60 = tpu.matmul %57, %59, %cst_70 {dimension_numbers = #tpu.dot_dimension_numbers<[1], [0], [0], [1], [0, 0, 1, 1], [], []>} : vector<128x4xf32>, vector<4x8xf32>, vector<128x8xf32> -> vector<128x8xf32>
    %61 = arith.addf %55, %60 : vector<128x8xf32>
    %c2_71 = arith.constant 2 : index
    %c1_72 = arith.constant 1 : index
    %c0_73 = arith.constant 0 : index
    %62 = vector.load %arg8[%c2_71, %c1_72, %c0_73] : memref<10x18x4xf32, #tpu.memory_space<vmem>>, vector<8x16x4xf32>
    %63 = vector.shape_cast %62 : vector<8x16x4xf32> to vector<128x4xf32>
    %c7 = arith.constant 7 : index
    %c0_74 = arith.constant 0 : index
    %c0_75 = arith.constant 0 : index
    %64 = vector.load %arg5[%c7, %c0_74, %c0_75] : memref<9x4x8xf32, #tpu.memory_space<vmem>>, vector<1x4x8xf32>
    %65 = vector.shape_cast %64 : vector<1x4x8xf32> to vector<4x8xf32>
    %cst_76 = arith.constant dense<0.000000e+00> : vector<128x8xf32>
    %66 = tpu.matmul %63, %65, %cst_76 {dimension_numbers = #tpu.dot_dimension_numbers<[1], [0], [0], [1], [0, 0, 1, 1], [], []>} : vector<128x4xf32>, vector<4x8xf32>, vector<128x8xf32> -> vector<128x8xf32>
    %67 = arith.addf %61, %66 : vector<128x8xf32>
    %c2_77 = arith.constant 2 : index
    %c2_78 = arith.constant 2 : index
    %c0_79 = arith.constant 0 : index
    %68 = vector.load %arg8[%c2_77, %c2_78, %c0_79] : memref<10x18x4xf32, #tpu.memory_space<vmem>>, vector<8x16x4xf32>
    %69 = vector.shape_cast %68 : vector<8x16x4xf32> to vector<128x4xf32>
    %c8 = arith.constant 8 : index
    %c0_80 = arith.constant 0 : index
    %c0_81 = arith.constant 0 : index
    %70 = vector.load %arg5[%c8, %c0_80, %c0_81] : memref<9x4x8xf32, #tpu.memory_space<vmem>>, vector<1x4x8xf32>
    %71 = vector.shape_cast %70 : vector<1x4x8xf32> to vector<4x8xf32>
    %cst_82 = arith.constant dense<0.000000e+00> : vector<128x8xf32>
    %72 = tpu.matmul %69, %71, %cst_82 {dimension_numbers = #tpu.dot_dimension_numbers<[1], [0], [0], [1], [0, 0, 1, 1], [], []>} : vector<128x4xf32>, vector<4x8xf32>, vector<128x8xf32> -> vector<128x8xf32>
    %73 = arith.addf %67, %72 : vector<128x8xf32>
    %c0_83 = arith.constant 0 : index
    %c0_84 = arith.constant 0 : index
    %74 = vector.load %arg6[%c0_83, %c0_84] : memref<1x8xf32, #tpu.memory_space<vmem>>, vector<1x8xf32>
    %75 = vector.broadcast %74 : vector<1x8xf32> to vector<128x8xf32>
    %76 = arith.addf %73, %75 : vector<128x8xf32>
    %cst_85 = arith.constant 0.000000e+00 : f32
    %77 = vector.broadcast %cst_85 : f32 to vector<128x8xf32>
    %78 = arith.maximumf %76, %77 : vector<128x8xf32>
    %79 = vector.shape_cast %78 : vector<128x8xf32> to vector<8x16x8xf32>
    %c0_86 = arith.constant 0 : index
    %c0_87 = arith.constant 0 : index
    %c0_88 = arith.constant 0 : index
    %c0_89 = arith.constant 0 : index
    %80 = vector.load %arg2[%c0_86, %c0_87, %c0_88, %c0_89] : memref<1x8x16x4xf32, #tpu.memory_space<vmem>>, vector<1x8x16x4xf32>
    %81 = vector.shape_cast %80 : vector<1x8x16x4xf32> to vector<8x16x4xf32>
    %c0_90 = arith.constant 0 : index
    %c0_91 = arith.constant 0 : index
    %c0_92 = arith.constant 0 : index
    %c0_93 = arith.constant 0 : index
    %82 = vector.load %arg7[%c0_90, %c0_91, %c0_92, %c0_93] : memref<1x8x16x12xf32, #tpu.memory_space<vmem>>, vector<1x8x16x4xf32>
    %83 = vector.shape_cast %82 : vector<1x8x16x4xf32> to vector<8x16x4xf32>
    %84 = vector.shape_cast %81 : vector<8x16x4xf32> to vector<1x8x16x4xf32>
    tpu.vector_store %arg7[%c0_90, %c0_91, %c0_92, %c0_93], %84 {strides = array<i32>} : memref<1x8x16x12xf32, #tpu.memory_space<vmem>>, vector<1x8x16x4xf32>,
    %c0_94 = arith.constant 0 : index
    %c0_95 = arith.constant 0 : index
    %c0_96 = arith.constant 0 : index
    %c4_97 = arith.constant 4 : index
    %85 = vector.load %arg7[%c0_94, %c0_95, %c0_96, %c4_97] : memref<1x8x16x12xf32, #tpu.memory_space<vmem>>, vector<1x8x16x8xf32>
    %86 = vector.shape_cast %85 : vector<1x8x16x8xf32> to vector<8x16x8xf32>
    %87 = vector.shape_cast %79 : vector<8x16x8xf32> to vector<1x8x16x8xf32>
    tpu.vector_store %arg7[%c0_94, %c0_95, %c0_96, %c4_97], %87 {strides = array<i32>} : memref<1x8x16x12xf32, #tpu.memory_space<vmem>>, vector<1x8x16x8xf32>,
    return
  }
  func.func @transform_0(%arg0: i32, %arg1: i32) -> (i32, i32, i32, i32) {
    %c0_i32 = arith.constant 0 : i32
    %c0_i32_0 = arith.constant 0 : i32
    %c0_i32_1 = arith.constant 0 : i32
    return %arg0, %arg1, %c0_i32, %c0_i32_0 : i32, i32, i32, i32
  }
  func.func @transform_1(%arg0: i32, %arg1: i32) -> (i32, i32, i32, i32) {
    %c8_i32 = arith.constant 8 : i32
    %0 = arith.muli %arg1, %c8_i32 : i32
    %c1_i32 = arith.constant 1 : i32
    %1 = arith.subi %0, %c1_i32 : i32
    %c0_i32 = arith.constant 0 : i32
    %2 = arith.maxsi %1, %c0_i32 : i32
    %c0_i32_0 = arith.constant 0 : i32
    %c0_i32_1 = arith.constant 0 : i32
    %c0_i32_2 = arith.constant 0 : i32
    return %arg0, %2, %c0_i32_0, %c0_i32_1 : i32, i32, i32, i32
  }
  func.func @transform_2(%arg0: i32, %arg1: i32) -> (i32, i32, i32, i32) {
    %c1_i32 = arith.constant 1 : i32
    %0 = arith.addi %arg1, %c1_i32 : i32
    %c8_i32 = arith.constant 8 : i32
    %1 = arith.muli %0, %c8_i32 : i32
    %c15_i32 = arith.constant 15 : i32
    %2 = arith.minsi %1, %c15_i32 : i32
    %c0_i32 = arith.constant 0 : i32
    %c0_i32_0 = arith.constant 0 : i32
    %c0_i32_1 = arith.constant 0 : i32
    return %arg0, %2, %c0_i32, %c0_i32_0 : i32, i32, i32, i32
  }
  func.func @transform_3(%arg0: i32, %arg1: i32) -> (i32, i32, i32) {
    %c0_i32 = arith.constant 0 : i32
    %c0_i32_0 = arith.constant 0 : i32
    %c0_i32_1 = arith.constant 0 : i32
    %c0_i32_2 = arith.constant 0 : i32
    return %c0_i32, %c0_i32_0, %c0_i32_1 : i32, i32, i32
  }
  func.func @transform_4(%arg0: i32, %arg1: i32) -> (i32, i32) {
    %c0_i32 = arith.constant 0 : i32
    %c0_i32_0 = arith.constant 0 : i32
    %c0_i32_1 = arith.constant 0 : i32
    return %c0_i32, %c0_i32_0 : i32, i32
  }
  func.func @transform_5(%arg0: i32, %arg1: i32) -> (i32, i32, i32, i32) {
    %c0_i32 = arith.constant 0 : i32
    %c0_i32_0 = arith.constant 0 : i32
    %c0_i32_1 = arith.constant 0 : i32
    return %arg0, %arg1, %c0_i32, %c0_i32_0 : i32, i32, i32, i32
  }
}

</mosaic_0001>

<llo_original>
// kernel: tpu_custom_call.1
$region0: #{tpu_custom_call.1}
  #allocation0 [shape = 'u32[]', space=smem, size = 0x4, offset = 0x4, fixed_abs, tag = 'smem constant byte address 0x4 - core index']
  #allocation1 [shape = 'u32[72,128]{1,0:T(1,128)}', space=vmem, size = 0x9000, scoped, tag = 'internal scratch']
  #allocation2 [shape = 'f32[10,18,4]{2,1,0:T(8,128)}', space=vmem, size = 0x1e000, scoped, tag = 'scratch operand']
  %s0 = inlined_call_operand.vmem [shape: f32[2,16,16,4], index: 0, kind: input, shape index: {}]
  %s1 = inlined_call_operand.vmem [shape: f32[2,16,16,4], index: 1, kind: input, shape index: {}]
  %s2 = inlined_call_operand.vmem [shape: f32[2,16,16,4], index: 2, kind: input, shape index: {}]
  %s3 = inlined_call_operand.vmem [shape: f32[9,4,8], index: 3, kind: input, shape index: {}]
  %s4 = inlined_call_operand.vmem [shape: f32[1,8], index: 4, kind: input, shape index: {}]
  %s5 = inlined_call_operand.vmem [shape: f32[2,16,16,12], index: 5, kind: output, shape index: {}]
  %s6 = sld [smem:[#allocation0]]
  $region61: #{tpu_custom_call.1} parent=0
    _
  %s8 = ssub.s32 1, %s6
  %s9 = scalar_select 0, %s8, %s6
  loop: start=0, step=1, limit=6
  $region2: #{tpu_custom_call.1} parent=0 // loop_pre_header
    _
  $region3: #{tpu_custom_call.1} parent=0 // loop_header
    %s11 = sphi 0, %s15
    %p12 = scmp.ge.s32.totalorder %s11, 6
    %s18 = sphi 0, %s30
    %s19 = sphi 0, %s26
    %s20 = sphi 0, %s18
    %s21 = sphi 0, %s19
    %s22 = sphi 0, %s20
    %s23 = sphi 0, %s21
    %s35 = sphi 0, %s37
    %s38 = sphi 0, %s35
    %s39 = sphi 0, %s38
    %s55 = sphi 0, %s39
    %s71 = sphi 0, %s73
    %s74 = sphi 0, %s71
    %s75 = sphi 0, %s74
    %s91 = sphi 0, %s75
    %s107 = sphi 0, %s109
    %s110 = sphi 0, %s107
    %s111 = sphi 0, %s110
    %s127 = sphi 0, %s111
    %s131 = sphi 0, %s131
    %s133 = sphi 0, %s131
    %s134 = sphi 0, %s133
    %s148 = sphi 0, %s134
    %s152 = sphi 0, %s152
    %s154 = sphi 0, %s152
    %s155 = sphi 0, %s154
    %s169 = sphi 0, %s155
    %s177 = sphi 0, %s179
    %s180 = sphi 0, %s177
    %s181 = sphi 0, %s180
    %s197 = sphi 0, %s181
  $region4: #{tpu_custom_call.1} parent=0 // loop_header_branch
    %14 = sbr.rel (%p12) target = $region8
  $region5: #{tpu_custom_call.1} parent=0 // loop_body
    %s16 = ssub.s32 %s11, 1
    %s17 = ssub.s32 %s11, 2
    %s24 = sadd.s32 1, %s19
    %p25 = scmp.ge.s32.totalorder %s24, 2
    %s26 = scalar_select %p25, 0, %s24
    %s27 = sadd.s32 1, %s18
    %s28 = scalar_select %p25, %s27, %s18
    %p29 = scmp.ge.s32.totalorder %s28, 2
    %s30 = scalar_select %p29, 0, %s28
    %s31 = ssub.s32 %s18, %s30
    %s32 = ssub.s32 %s19, %s26
    %s33 = sor.u32 %s31, %s32
    %p34 = scmp.eq.s32.totalorder %s33, 0
    %s36 = sadd.s32 %s35, 1
    %s37 = scalar_select %p34, %s35, %s36
    %p40 = pneg %p34
    %p41 = scmp.eq.s32.totalorder %s11, 3
    %p42 = por %p40, %p41
    %p43 = scmp.ne.s32.totalorder %s35, %s38
    %p44 = scmp.eq.s32.totalorder %s11, 0
    %p45 = por %p43, %p44
    %p46 = scmp.ne.s32.totalorder %s35, %s38
    %p47 = scmp.eq.s32.totalorder %s16, 3
    %p48 = por %p46, %p47
    %p49 = scmp.ne.s32.totalorder %s38, %s39
    %p50 = scmp.eq.s32.totalorder %s16, 0
    %p51 = por %p49, %p50
    %p52 = scmp.ne.s32.totalorder %s38, %s39
    %p53 = scmp.eq.s32.totalorder %s17, 3
    %p54 = por %p52, %p53
    %p56 = scmp.ne.s32.totalorder %s39, %s55
    %p57 = scmp.eq.s32.totalorder %s17, 0
    %p58 = por %p56, %p57
    %s59 = smul.u32 %s19, 8
    %s60 = ssub.s32 %s59, 1
    %p61 = scmp.gt.s32.totalorder %s60, 0
    %s62 = scalar_select %p61, %s60, 0
    %s63 = smul.u32 %s26, 8
    %s64 = ssub.s32 %s63, 1
    %p65 = scmp.gt.s32.totalorder %s64, 0
    %s66 = scalar_select %p65, %s64, 0
    %s67 = ssub.s32 %s18, %s30
    %s68 = ssub.s32 %s62, %s66
    %s69 = sor.u32 %s67, %s68
    %p70 = scmp.eq.s32.totalorder %s69, 0
    %s72 = sadd.s32 %s71, 1
    %s73 = scalar_select %p70, %s71, %s72
    %p76 = pneg %p70
    %p77 = scmp.eq.s32.totalorder %s11, 3
    %p78 = por %p76, %p77
    %p79 = scmp.ne.s32.totalorder %s71, %s74
    %p80 = scmp.eq.s32.totalorder %s11, 0
    %p81 = por %p79, %p80
    %p82 = scmp.ne.s32.totalorder %s71, %s74
    %p83 = scmp.eq.s32.totalorder %s16, 3
    %p84 = por %p82, %p83
    %p85 = scmp.ne.s32.totalorder %s74, %s75
    %p86 = scmp.eq.s32.totalorder %s16, 0
    %p87 = por %p85, %p86
    %p88 = scmp.ne.s32.totalorder %s74, %s75
    %p89 = scmp.eq.s32.totalorder %s17, 3
    %p90 = por %p88, %p89
    %p92 = scmp.ne.s32.totalorder %s75, %s91
    %p93 = scmp.eq.s32.totalorder %s17, 0
    %p94 = por %p92, %p93
    %s95 = sadd.s32 %s19, 1
    %s96 = smul.u32 %s95, 8
    %p97 = scmp.lt.s32.totalorder %s96, 15
    %s98 = scalar_select %p97, %s96, 15
    %s99 = sadd.s32 %s26, 1
    %s100 = smul.u32 %s99, 8
    %p101 = scmp.lt.s32.totalorder %s100, 15
    %s102 = scalar_select %p101, %s100, 15
    %s103 = ssub.s32 %s18, %s30
    %s104 = ssub.s32 %s98, %s102
    %s105 = sor.u32 %s103, %s104
    %p106 = scmp.eq.s32.totalorder %s105, 0
    %s108 = sadd.s32 %s107, 1
    %s109 = scalar_select %p106, %s107, %s108
    %p112 = pneg %p106
    %p113 = scmp.eq.s32.totalorder %s11, 3
    %p114 = por %p112, %p113
    %p115 = scmp.ne.s32.totalorder %s107, %s110
    %p116 = scmp.eq.s32.totalorder %s11, 0
    %p117 = por %p115, %p116
    %p118 = scmp.ne.s32.totalorder %s107, %s110
    %p119 = scmp.eq.s32.totalorder %s16, 3
    %p120 = por %p118, %p119
    %p121 = scmp.ne.s32.totalorder %s110, %s111
    %p122 = scmp.eq.s32.totalorder %s16, 0
    %p123 = por %p121, %p122
    %p124 = scmp.ne.s32.totalorder %s110, %s111
    %p125 = scmp.eq.s32.totalorder %s17, 3
    %p126 = por %p124, %p125
    %p128 = scmp.ne.s32.totalorder %s111, %s127
    %p129 = scmp.eq.s32.totalorder %s17, 0
    %p130 = por %p128, %p129
    %s132 = sadd.s32 %s131, 1
    %p135 = scmp.eq.s32.totalorder %s11, 3
    %p136 = scmp.ne.s32.totalorder %s131, %s133
    %p137 = scmp.eq.s32.totalorder %s11, 0
    %p138 = por %p136, %p137
    %p139 = scmp.ne.s32.totalorder %s131, %s133
    %p140 = scmp.eq.s32.totalorder %s16, 3
    %p141 = por %p139, %p140
    %p142 = scmp.ne.s32.totalorder %s133, %s134
    %p143 = scmp.eq.s32.totalorder %s16, 0
    %p144 = por %p142, %p143
    %p145 = scmp.ne.s32.totalorder %s133, %s134
    %p146 = scmp.eq.s32.totalorder %s17, 3
    %p147 = por %p145, %p146
    %p149 = scmp.ne.s32.totalorder %s134, %s148
    %p150 = scmp.eq.s32.totalorder %s17, 0
    %p151 = por %p149, %p150
    %s153 = sadd.s32 %s152, 1
    %p156 = scmp.eq.s32.totalorder %s11, 3
    %p157 = scmp.ne.s32.totalorder %s152, %s154
    %p158 = scmp.eq.s32.totalorder %s11, 0
    %p159 = por %p157, %p158
    %p160 = scmp.ne.s32.totalorder %s152, %s154
    %p161 = scmp.eq.s32.totalorder %s16, 3
    %p162 = por %p160, %p161
    %p163 = scmp.ne.s32.totalorder %s154, %s155
    %p164 = scmp.eq.s32.totalorder %s16, 0
    %p165 = por %p163, %p164
    %p166 = scmp.ne.s32.totalorder %s154, %s155
    %p167 = scmp.eq.s32.totalorder %s17, 3
    %p168 = por %p166, %p167
    %p170 = scmp.ne.s32.totalorder %s155, %s169
    %p171 = scmp.eq.s32.totalorder %s17, 0
    %p172 = por %p170, %p171
    %s173 = ssub.s32 %s18, %s30
    %s174 = ssub.s32 %s19, %s26
    %s175 = sor.u32 %s173, %s174
    %p176 = scmp.eq.s32.totalorder %s175, 0
    %s178 = sadd.s32 %s177, 1
    %s179 = scalar_select %p176, %s177, %s178
    %p182 = pneg %p176
    %p183 = scmp.eq.s32.totalorder %s11, 3
    %p184 = por %p182, %p183
    %p185 = scmp.ne.s32.totalorder %s177, %s180
    %p186 = scmp.eq.s32.totalorder %s11, 0
    %p187 = por %p185, %p186
    %p188 = scmp.ne.s32.totalorder %s177, %s180
    %p189 = scmp.eq.s32.totalorder %s16, 3
    %p190 = por %p188, %p189
    %p191 = scmp.ne.s32.totalorder %s180, %s181
    %p192 = scmp.eq.s32.totalorder %s16, 0
    %p193 = por %p191, %p192
    %p194 = scmp.ne.s32.totalorder %s180, %s181
    %p195 = scmp.eq.s32.totalorder %s17, 3
    %p196 = por %p194, %p195
    %p198 = scmp.ne.s32.totalorder %s181, %s197
    %p199 = scmp.eq.s32.totalorder %s17, 0
    %p200 = por %p198, %p199
    %p201 = scmp.le.s32.totalorder 1, %s11
    %p202 = scmp.lt.s32.totalorder %s11, 5
    %p203 = pnand %p201, %p202
    %p204 = pneg %p203
    // Predicated region
    $region9: #{tpu_custom_call.1} parent=5 // pred_check
      _
    $region10: #{tpu_custom_call.1} parent=5 // pred_check_branch
      %206 = sbr.rel (%p203) target = $region12
    $region11: #{tpu_custom_call.1} parent=5 // pred_region
      %s207 = ssub.s32 %s11, 1
      // Predicated region
      $region13: #{tpu_custom_call.1} parent=11 // pred_check
        %p208 = pneg %p144
      $region14: #{tpu_custom_call.1} parent=11 // pred_check_branch
        %210 = sbr.rel (%p208) target = $region16
      $region15: #{tpu_custom_call.1} parent=11 // pred_region
        _
      $region16: #{tpu_custom_call.1} parent=11 // pred_fallthru
        _
      // Predicated region
      $region17: #{tpu_custom_call.1} parent=11 // pred_check
        %p211 = pneg %p165
      $region18: #{tpu_custom_call.1} parent=11 // pred_check_branch
        %213 = sbr.rel (%p211) target = $region20
      $region19: #{tpu_custom_call.1} parent=11 // pred_region
        _
      $region20: #{tpu_custom_call.1} parent=11 // pred_fallthru
        _
    $region12: #{tpu_custom_call.1} parent=5 // pred_fallthru
      _
    %p214 = scmp.lt.s32.totalorder %s11, 4
    // Predicated region
    $region21: #{tpu_custom_call.1} parent=5 // pred_check
      %p215 = pneg %p214
    $region22: #{tpu_custom_call.1} parent=5 // pred_check_branch
      %217 = sbr.rel (%p215) target = $region24
    $region23: #{tpu_custom_call.1} parent=5 // pred_region
      // Predicated region
      $region25: #{tpu_custom_call.1} parent=23 // pred_check
        %p218 = pneg %p45
      $region26: #{tpu_custom_call.1} parent=23 // pred_check_branch
        %220 = sbr.rel (%p218) target = $region28
      $region27: #{tpu_custom_call.1} parent=23 // pred_region
        %s221 = smul.u32 8, %s19
        %p222 = scmp.lt.s32.totalorder %s18, 1
        %s223 = scalar_select %p222, %s18, 1
        %p224 = scmp.lt.s32.totalorder %s221, 15
        %s225 = scalar_select %p224, %s221, 15
        %s226 = smul.addr %s225, 2
        %s227 = smul.addr %s223, 32
        %s228 = sadd.s32 %s226, %s227
        %s229 = smul.addr %s228, 8
        %s230 = scalar_lea.vmem %s0, %s229
        %s231 = smul.u32 8, %s19
      $region28: #{tpu_custom_call.1} parent=23 // pred_fallthru
        _
      // Predicated region
      $region29: #{tpu_custom_call.1} parent=23 // pred_check
        %p232 = pneg %p81
      $region30: #{tpu_custom_call.1} parent=23 // pred_check_branch
        %234 = sbr.rel (%p232) target = $region32
      $region31: #{tpu_custom_call.1} parent=23 // pred_region
        %s235 = smul.u32 %s19, 8
        %s236 = ssub.s32 %s235, 1
        %p237 = scmp.gt.s32.totalorder %s236, 0
        %s238 = scalar_select %p237, %s236, 0
        %p239 = scmp.lt.s32.totalorder %s18, 1
        %s240 = scalar_select %p239, %s18, 1
        %p241 = scmp.lt.s32.totalorder %s238, 15
        %s242 = scalar_select %p241, %s238, 15
        %s243 = smul.addr %s242, 2
        %s244 = smul.addr %s240, 32
        %s245 = sadd.s32 %s243, %s244
        %s246 = smul.addr %s245, 8
        %s247 = scalar_lea.vmem %s1, %s246
        %s248 = smul.u32 %s19, 8
        %s249 = ssub.s32 %s248, 1
        %p250 = scmp.gt.s32.totalorder %s249, 0
        %s251 = scalar_select %p250, %s249, 0
      $region32: #{tpu_custom_call.1} parent=23 // pred_fallthru
        _
      // Predicated region
      $region33: #{tpu_custom_call.1} parent=23 // pred_check
        %p252 = pneg %p117
      $region34: #{tpu_custom_call.1} parent=23 // pred_check_branch
        %254 = sbr.rel (%p252) target = $region36
      $region35: #{tpu_custom_call.1} parent=23 // pred_region
        %s255 = sadd.s32 %s19, 1
        %s256 = smul.u32 %s255, 8
        %p257 = scmp.lt.s32.totalorder %s256, 15
        %s258 = scalar_select %p257, %s256, 15
        %p259 = scmp.lt.s32.totalorder %s18, 1
        %s260 = scalar_select %p259, %s18, 1
        %p261 = scmp.lt.s32.totalorder %s258, 15
        %s262 = scalar_select %p261, %s258, 15
        %s263 = smul.addr %s262, 2
        %s264 = smul.addr %s260, 32
        %s265 = sadd.s32 %s263, %s264
        %s266 = smul.addr %s265, 8
        %s267 = scalar_lea.vmem %s2, %s266
        %s268 = sadd.s32 %s19, 1
        %s269 = smul.u32 %s268, 8
        %p270 = scmp.lt.s32.totalorder %s269, 15
        %s271 = scalar_select %p270, %s269, 15
      $region36: #{tpu_custom_call.1} parent=23 // pred_fallthru
        _
    $region24: #{tpu_custom_call.1} parent=5 // pred_fallthru
      _
    %p272 = scmp.le.s32.totalorder 1, %s11
    %p273 = scmp.lt.s32.totalorder %s11, 5
    %p274 = pnand %p272, %p273
    %p275 = pneg %p274
    // Predicated region
    $region37: #{tpu_custom_call.1} parent=5 // pred_check
      _
    $region38: #{tpu_custom_call.1} parent=5 // pred_check_branch
      %277 = sbr.rel (%p274) target = $region40
    $region39: #{tpu_custom_call.1} parent=5 // pred_region
      %s278 = ssub.s32 %s11, 1
      %s279 = smul.u32 8, %s21
      %p280 = scmp.lt.s32.totalorder %s20, 1
      %s281 = scalar_select %p280, %s20, 1
      %p282 = scmp.lt.s32.totalorder %s279, 15
      %s283 = scalar_select %p282, %s279, 15
      %s284 = smul.addr %s283, 2
      %s285 = smul.addr %s281, 32
      %s286 = sadd.s32 %s284, %s285
      %s287 = smul.addr %s286, 8
      %s288 = scalar_lea.vmem %s0, %s287
      %p289 = pneg %p51
      %p290 = pneg %p48
      %s291 = smul.u32 %s21, 8
      %s292 = ssub.s32 %s291, 1
      %p293 = scmp.gt.s32.totalorder %s292, 0
      %s294 = scalar_select %p293, %s292, 0
      %p295 = scmp.lt.s32.totalorder %s20, 1
      %s296 = scalar_select %p295, %s20, 1
      %p297 = scmp.lt.s32.totalorder %s294, 15
      %s298 = scalar_select %p297, %s294, 15
      %s299 = smul.addr %s298, 2
      %s300 = smul.addr %s296, 32
      %s301 = sadd.s32 %s299, %s300
      %s302 = smul.addr %s301, 8
      %s303 = scalar_lea.vmem %s1, %s302
      %p304 = pneg %p87
      %p305 = pneg %p84
      %s306 = sadd.s32 %s21, 1
      %s307 = smul.u32 %s306, 8
      %p308 = scmp.lt.s32.totalorder %s307, 15
      %s309 = scalar_select %p308, %s307, 15
      %p310 = scmp.lt.s32.totalorder %s20, 1
      %s311 = scalar_select %p310, %s20, 1
      %p312 = scmp.lt.s32.totalorder %s309, 15
      %s313 = scalar_select %p312, %s309, 15
      %s314 = smul.addr %s313, 2
      %s315 = smul.addr %s311, 32
      %s316 = sadd.s32 %s314, %s315
      %s317 = smul.addr %s316, 8
      %s318 = scalar_lea.vmem %s2, %s317
      %p319 = pneg %p123
      %p320 = pneg %p120
      %p321 = pneg %p144
      %p322 = pneg %p141
      %p323 = pneg %p165
      %p324 = pneg %p162
      %p325 = pneg %p193
      %p326 = pneg %p190
      %s327 = smul.u32 8, %s21
      %p328 = scmp.lt.s32.totalorder %s20, 1
      %s329 = scalar_select %p328, %s20, 1
      %p330 = scmp.lt.s32.totalorder %s327, 15
      %s331 = scalar_select %p330, %s327, 15
      %s332 = smul.addr %s331, 2
      %s333 = smul.addr %s329, 32
      %s334 = sadd.s32 %s332, %s333
      %s335 = smul.addr %s334, 8
      %s336 = scalar_lea.vmem %s5, %s335
      %s337 = smul.u32 8, %s21
      %p338 = scmp.lt.s32.totalorder %s20, 1
      %s339 = scalar_select %p338, %s20, 1
      %p340 = scmp.lt.s32.totalorder %s337, 15
      %s341 = scalar_select %p340, %s337, 15
      %s342 = smul.addr %s341, 2
      %s343 = smul.addr %s339, 32
      %s344 = sadd.s32 %s342, %s343
      %s345 = smul.addr %s344, 8
      %s346 = scalar_lea.vmem %s0, %s345
      %s347 = smul.u32 8, %s21
      %s348 = smul.u32 %s21, 8
      %s349 = ssub.s32 %s348, 1
      %p350 = scmp.gt.s32.totalorder %s349, 0
      %s351 = scalar_select %p350, %s349, 0
      %p352 = scmp.lt.s32.totalorder %s20, 1
      %s353 = scalar_select %p352, %s20, 1
      %p354 = scmp.lt.s32.totalorder %s351, 15
      %s355 = scalar_select %p354, %s351, 15
      %s356 = smul.addr %s355, 2
      %s357 = smul.addr %s353, 32
      %s358 = sadd.s32 %s356, %s357
      %s359 = smul.addr %s358, 8
      %s360 = scalar_lea.vmem %s1, %s359
      %s361 = smul.u32 %s21, 8
      %s362 = ssub.s32 %s361, 1
      %p363 = scmp.gt.s32.totalorder %s362, 0
      %s364 = scalar_select %p363, %s362, 0
      %s365 = sadd.s32 %s21, 1
      %s366 = smul.u32 %s365, 8
      %p367 = scmp.lt.s32.totalorder %s366, 15
      %s368 = scalar_select %p367, %s366, 15
      %p369 = scmp.lt.s32.totalorder %s20, 1
      %s370 = scalar_select %p369, %s20, 1
      %p371 = scmp.lt.s32.totalorder %s368, 15
      %s372 = scalar_select %p371, %s368, 15
      %s373 = smul.addr %s372, 2
      %s374 = smul.addr %s370, 32
      %s375 = sadd.s32 %s373, %s374
      %s376 = smul.addr %s375, 8
      %s377 = scalar_lea.vmem %s2, %s376
      %s378 = sadd.s32 %s21, 1
      %s379 = smul.u32 %s378, 8
      %p380 = scmp.lt.s32.totalorder %s379, 15
      %s381 = scalar_select %p380, %s379, 15
      %s382 = smul.u32 8, %s21
      %p383 = scmp.lt.s32.totalorder %s20, 1
      %s384 = scalar_select %p383, %s20, 1
      %p385 = scmp.lt.s32.totalorder %s382, 15
      %s386 = scalar_select %p385, %s382, 15
      %s387 = smul.addr %s386, 2
      %s388 = smul.addr %s384, 32
      %s389 = sadd.s32 %s387, %s388
      %s390 = smul.addr %s389, 8
      %s391 = scalar_lea.vmem %s5, %s390
      %s392 = smul.u32 8, %s21
      %v393 = vld [vmem:[%s346] sm:$0xff]
      %v394 = vld [vmem:[%s346 + $0x8] sm:$0xff]
      %v395 = vld [vmem:[%s346 + $0x10] sm:$0xff]
      %v396 = vld [vmem:[%s346 + $0x18] sm:$0xff]
      %v397 = vld [vmem:[%s346 + $0x20] sm:$0xff]
      %v398 = vld [vmem:[%s346 + $0x28] sm:$0xff]
      %v399 = vld [vmem:[%s346 + $0x30] sm:$0xff]
      %v400 = vld [vmem:[%s346 + $0x38] sm:$0xff]
      %v401 = vld [vmem:[%s346 + $0x40] sm:$0xff]
      %v402 = vld [vmem:[%s346 + $0x48] sm:$0xff]
      %v403 = vld [vmem:[%s346 + $0x50] sm:$0xff]
      %v404 = vld [vmem:[%s346 + $0x58] sm:$0xff]
      %v405 = vld [vmem:[%s346 + $0x60] sm:$0xff]
      %v406 = vld [vmem:[%s346 + $0x68] sm:$0xff]
      %v407 = vld [vmem:[%s346 + $0x70] sm:$0xff]
      %v408 = vld [vmem:[%s346 + $0x78] sm:$0xff]
      %s409 = scalar_lea.vmem [#allocation2], 24
      %vm410 = vcmask 31744
      %411 = vst.msk [vmem:[%s409 + $0x1] sm:$0xff] %vm410, %v393
      %412 = vst.msk [vmem:[%s409 + $0x9] sm:$0xff] %vm410, %v394
      %413 = vst.msk [vmem:[%s409 + $0x19] sm:$0xff] %vm410, %v395
      %414 = vst.msk [vmem:[%s409 + $0x21] sm:$0xff] %vm410, %v396
      %415 = vst.msk [vmem:[%s409 + $0x31] sm:$0xff] %vm410, %v397
      %416 = vst.msk [vmem:[%s409 + $0x39] sm:$0xff] %vm410, %v398
      %417 = vst.msk [vmem:[%s409 + $0x49] sm:$0xff] %vm410, %v399
      %418 = vst.msk [vmem:[%s409 + $0x51] sm:$0xff] %vm410, %v400
      %419 = vst.msk [vmem:[%s409 + $0x61] sm:$0xff] %vm410, %v401
      %420 = vst.msk [vmem:[%s409 + $0x69] sm:$0xff] %vm410, %v402
      %421 = vst.msk [vmem:[%s409 + $0x79] sm:$0xff] %vm410, %v403
      %422 = vst.msk [vmem:[%s409 + $0x81] sm:$0xff] %vm410, %v404
      %423 = vst.msk [vmem:[%s409 + $0x91] sm:$0xff] %vm410, %v405
      %424 = vst.msk [vmem:[%s409 + $0x99] sm:$0xff] %vm410, %v406
      %425 = vst.msk [vmem:[%s409 + $0xa9] sm:$0xff] %vm410, %v407
      %426 = vst.msk [vmem:[%s409 + $0xb1] sm:$0xff] %vm410, %v408
      %v427 = vld [vmem:[%s360] sm:$0xff]
      %v428 = vld [vmem:[%s360 + $0x8] sm:$0xff]
      %429 = vst.msk [vmem:[#allocation2 + $0x1] sm:$0xff] %vm410, %v427
      %430 = vst.msk [vmem:[#allocation2 + $0x9] sm:$0xff] %vm410, %v428
      %v431 = vld [vmem:[%s377] sm:$0xff]
      %v432 = vld [vmem:[%s377 + $0x8] sm:$0xff]
      %s433 = scalar_lea.vmem [#allocation2], 216
      %434 = vst.msk [vmem:[%s433 + $0x1] sm:$0xff] %vm410, %v431
      %435 = vst.msk [vmem:[%s433 + $0x9] sm:$0xff] %vm410, %v432
      %vm436 = vcmask 24576
      %437 = vst.msk [vmem:[#allocation2] sm:$0x1] %vm436, 0.0
      %438 = vst.msk [vmem:[#allocation2 + $0x18] sm:$0x1] %vm436, 0.0
      %439 = vst.msk [vmem:[#allocation2 + $0x30] sm:$0x1] %vm436, 0.0
      %440 = vst.msk [vmem:[#allocation2 + $0x48] sm:$0x1] %vm436, 0.0
      %441 = vst.msk [vmem:[#allocation2 + $0x60] sm:$0x1] %vm436, 0.0
      %442 = vst.msk [vmem:[#allocation2 + $0x78] sm:$0x1] %vm436, 0.0
      %443 = vst.msk [vmem:[#allocation2 + $0x90] sm:$0x1] %vm436, 0.0
      %444 = vst.msk [vmem:[#allocation2 + $0xa8] sm:$0x1] %vm436, 0.0
      %445 = vst.msk [vmem:[#allocation2 + $0xc0] sm:$0x1] %vm436, 0.0
      %446 = vst.msk [vmem:[#allocation2 + $0xd8] sm:$0x1] %vm436, 0.0
      %447 = vst.msk [vmem:[#allocation2 + $0x11] sm:$0x1] %vm436, 0.0
      %448 = vst.msk [vmem:[#allocation2 + $0x29] sm:$0x1] %vm436, 0.0
      %449 = vst.msk [vmem:[#allocation2 + $0x41] sm:$0x1] %vm436, 0.0
      %450 = vst.msk [vmem:[#allocation2 + $0x59] sm:$0x1] %vm436, 0.0
      %451 = vst.msk [vmem:[#allocation2 + $0x71] sm:$0x1] %vm436, 0.0
      %452 = vst.msk [vmem:[#allocation2 + $0x89] sm:$0x1] %vm436, 0.0
      %453 = vst.msk [vmem:[#allocation2 + $0xa1] sm:$0x1] %vm436, 0.0
      %454 = vst.msk [vmem:[#allocation2 + $0xb9] sm:$0x1] %vm436, 0.0
      %455 = vst.msk [vmem:[#allocation2 + $0xd1] sm:$0x1] %vm436, 0.0
      %456 = vst.msk [vmem:[#allocation2 + $0xe9] sm:$0x1] %vm436, 0.0
      %p457 = scmp.eq.s32.totalorder %s21, 0
      // Predicated region
      $region41: #{tpu_custom_call.1} parent=39 // pred_check
        %p458 = pneg %p457
      $region42: #{tpu_custom_call.1} parent=39 // pred_check_branch
        %460 = sbr.rel (%p458) target = $region44
      $region43: #{tpu_custom_call.1} parent=39 // pred_region
        %461 = vst.msk [vmem:[#allocation2] sm:$0xff] %vm410, 0.0
        %462 = vst.msk [vmem:[#allocation2 + $0x8] sm:$0xff] %vm410, 0.0
        %vm463 = vcmask 25600
        %464 = vst.msk [vmem:[#allocation2 + $0x10] sm:$0x3] %vm463, 0.0
      $region44: #{tpu_custom_call.1} parent=39 // pred_fallthru
        _
      %p465 = scmp.eq.s32.totalorder %s21, 1
      // Predicated region
      $region45: #{tpu_custom_call.1} parent=39 // pred_check
        %p466 = pneg %p465
      $region46: #{tpu_custom_call.1} parent=39 // pred_check_branch
        %468 = sbr.rel (%p466) target = $region48
      $region47: #{tpu_custom_call.1} parent=39 // pred_region
        %469 = vst.msk [vmem:[%s433] sm:$0xff] %vm410, 0.0
        %470 = vst.msk [vmem:[%s433 + $0x8] sm:$0xff] %vm410, 0.0
        %vm471 = vcmask 25600
        %472 = vst.msk [vmem:[%s433 + $0x10] sm:$0x3] %vm471, 0.0
      $region48: #{tpu_custom_call.1} parent=39 // pred_fallthru
        _
      %v473 = vld [vmem:[#allocation2] sm:$0xff]
      %v474 = vld [vmem:[#allocation2 + $0x8] sm:$0xff]
      %v475 = vld [vmem:[#allocation2 + $0x18] sm:$0xff]
      %v476 = vld [vmem:[#allocation2 + $0x20] sm:$0xff]
      %v477 = vld [vmem:[#allocation2 + $0x30] sm:$0xff]
      %v478 = vld [vmem:[#allocation2 + $0x38] sm:$0xff]
      %v479 = vld [vmem:[#allocation2 + $0x48] sm:$0xff]
      %v480 = vld [vmem:[#allocation2 + $0x50] sm:$0xff]
      %v481 = vld [vmem:[#allocation2 + $0x60] sm:$0xff]
      %v482 = vld [vmem:[#allocation2 + $0x68] sm:$0xff]
      %v483 = vld [vmem:[#allocation2 + $0x78] sm:$0xff]
      %v484 = vld [vmem:[#allocation2 + $0x80] sm:$0xff]
      %v485 = vld [vmem:[#allocation2 + $0x90] sm:$0xff]
      %v486 = vld [vmem:[#allocation2 + $0x98] sm:$0xff]
      %v487 = vld [vmem:[#allocation2 + $0xa8] sm:$0xff]
      %v488 = vld [vmem:[#allocation2 + $0xb0] sm:$0xff]
      %v489 = vld [vmem:[%s3] sm:$0xf]
      %v490 = vld [vmem:[#allocation2 + $0x1] sm:$0xff]
      %v491 = vld [vmem:[#allocation2 + $0x9] sm:$0xff]
      %v492 = vld [vmem:[#allocation2 + $0x19] sm:$0xff]
      %v493 = vld [vmem:[#allocation2 + $0x21] sm:$0xff]
      %v494 = vld [vmem:[#allocation2 + $0x31] sm:$0xff]
      %v495 = vld [vmem:[#allocation2 + $0x39] sm:$0xff]
      %v496 = vld [vmem:[#allocation2 + $0x49] sm:$0xff]
      %v497 = vld [vmem:[#allocation2 + $0x51] sm:$0xff]
      %v498 = vld [vmem:[#allocation2 + $0x61] sm:$0xff]
      %v499 = vld [vmem:[#allocation2 + $0x69] sm:$0xff]
      %v500 = vld [vmem:[#allocation2 + $0x79] sm:$0xff]
      %v501 = vld [vmem:[#allocation2 + $0x81] sm:$0xff]
      %v502 = vld [vmem:[#allocation2 + $0x91] sm:$0xff]
      %v503 = vld [vmem:[#allocation2 + $0x99] sm:$0xff]
      %v504 = vld [vmem:[#allocation2 + $0xa9] sm:$0xff]
      %v505 = vld [vmem:[#allocation2 + $0xb1] sm:$0xff]
      %s506 = scalar_lea.vmem %s3, 4
      %v507 = vld [vmem:[%s506] sm:$0xf]
      %v509 = vsel %vm410, %v490, 0
      %v512 = vsel %vm410, %v491, 0
      %v515 = vsel %vm410, %v492, 0
      %v518 = vsel %vm410, %v493, 0
      %v521 = vsel %vm410, %v494, 0
      %v524 = vsel %vm410, %v495, 0
      %v527 = vsel %vm410, %v496, 0
      %v530 = vsel %vm410, %v497, 0
      %v533 = vsel %vm410, %v498, 0
      %v536 = vsel %vm410, %v499, 0
      %v539 = vsel %vm410, %v500, 0
      %v542 = vsel %vm410, %v501, 0
      %v545 = vsel %vm410, %v502, 0
      %v548 = vsel %vm410, %v503, 0
      %v551 = vsel %vm410, %v504, 0
      %v554 = vsel %vm410, %v505, 0
      %vm556 = vcmask 1043456
      %v558 = vsel %vm556, %v507, 0
      %560 = vmatpush.msra.mxu0 0.0
      %561 = vmatpush.msra.mxu0 0.0
      %562 = vmatpush.msra.mxu0 0.0
      %563 = vmatpush.msra.mxu0 0.0
      %564 = vmatpush.msra.mxu0 0.0
      %565 = vmatpush.msra.mxu0 0.0
      %566 = vmatpush.msra.mxu0 0.0
      %567 = vmatpush.msra.mxu0 0.0
      %568 = vmatpush.msra.mxu0 0.0
      %569 = vmatpush.msra.mxu0 0.0
      %570 = vmatpush.msra.mxu0 0.0
      %571 = vmatpush.msra.mxu0 0.0
      %572 = vmatpush.msra.mxu0 0.0
      %573 = vmatpush.msra.mxu0 0.0
      %574 = vmatpush.msra.mxu0 0.0
      %575 = vmatpush.msra.mxu0 %v558
      %576 = vmatmul.f32.gmra.mxu0 %v509
      %v577 = vpop.f32.mrf.mxu0
      %v578 = vadd.f32 0.0, %v577
      %579 = vmatmul.f32.gmra.mxu0 %v512
      %v580 = vpop.f32.mrf.mxu0
      %v581 = vadd.f32 0.0, %v580
      %582 = vmatmul.f32.gmra.mxu0 %v515
      %v583 = vpop.f32.mrf.mxu0
      %v584 = vadd.f32 0.0, %v583
      %585 = vmatmul.f32.gmra.mxu0 %v518
      %v586 = vpop.f32.mrf.mxu0
      %v587 = vadd.f32 0.0, %v586
      %588 = vmatmul.f32.gmra.mxu0 %v521
      %v589 = vpop.f32.mrf.mxu0
      %v590 = vadd.f32 0.0, %v589
      %591 = vmatmul.f32.gmra.mxu0 %v524
      %v592 = vpop.f32.mrf.mxu0
      %v593 = vadd.f32 0.0, %v592
      %594 = vmatmul.f32.gmra.mxu0 %v527
      %v595 = vpop.f32.mrf.mxu0
      %v596 = vadd.f32 0.0, %v595
      %597 = vmatmul.f32.gmra.mxu0 %v530
      %v598 = vpop.f32.mrf.mxu0
      %v599 = vadd.f32 0.0, %v598
      %600 = vmatmul.f32.gmra.mxu0 %v533
      %v601 = vpop.f32.mrf.mxu0
      %v602 = vadd.f32 0.0, %v601
      %603 = vmatmul.f32.gmra.mxu0 %v536
      %v604 = vpop.f32.mrf.mxu0
      %v605 = vadd.f32 0.0, %v604
      %606 = vmatmul.f32.gmra.mxu0 %v539
      %v607 = vpop.f32.mrf.mxu0
      %v608 = vadd.f32 0.0, %v607
      %609 = vmatmul.f32.gmra.mxu0 %v542
      %v610 = vpop.f32.mrf.mxu0
      %v611 = vadd.f32 0.0, %v610
      %612 = vmatmul.f32.gmra.mxu0 %v545
      %v613 = vpop.f32.mrf.mxu0
      %v614 = vadd.f32 0.0, %v613
      %615 = vmatmul.f32.gmra.mxu0 %v548
      %v616 = vpop.f32.mrf.mxu0
      %v617 = vadd.f32 0.0, %v616
      %618 = vmatmul.f32.gmra.mxu0 %v551
      %v619 = vpop.f32.mrf.mxu0
      %v620 = vadd.f32 0.0, %v619
      %621 = vmatmul.f32.gmra.mxu0 %v554
      %v622 = vpop.f32.mrf.mxu0
      %v623 = vadd.f32 0.0, %v622
      %624 = vdwg.mxu0
      %v626 = vsel %vm410, %v473, 0
      %v629 = vsel %vm410, %v474, 0
      %v632 = vsel %vm410, %v475, 0
      %v635 = vsel %vm410, %v476, 0
      %v638 = vsel %vm410, %v477, 0
      %v641 = vsel %vm410, %v478, 0
      %v644 = vsel %vm410, %v479, 0
      %v647 = vsel %vm410, %v480, 0
      %v650 = vsel %vm410, %v481, 0
      %v653 = vsel %vm410, %v482, 0
      %v656 = vsel %vm410, %v483, 0
      %v659 = vsel %vm410, %v484, 0
      %v662 = vsel %vm410, %v485, 0
      %v665 = vsel %vm410, %v486, 0
      %v668 = vsel %vm410, %v487, 0
      %v671 = vsel %vm410, %v488, 0
      %v674 = vsel %vm556, %v489, 0
      %676 = vmatpush.msra.mxu0 0.0
      %677 = vmatpush.msra.mxu0 0.0
      %678 = vmatpush.msra.mxu0 0.0
      %679 = vmatpush.msra.mxu0 0.0
      %680 = vmatpush.msra.mxu0 0.0
      %681 = vmatpush.msra.mxu0 0.0
      %682 = vmatpush.msra.mxu0 0.0
      %683 = vmatpush.msra.mxu0 0.0
      %684 = vmatpush.msra.mxu0 0.0
      %685 = vmatpush.msra.mxu0 0.0
      %686 = vmatpush.msra.mxu0 0.0
      %687 = vmatpush.msra.mxu0 0.0
      %688 = vmatpush.msra.mxu0 0.0
      %689 = vmatpush.msra.mxu0 0.0
      %690 = vmatpush.msra.mxu0 0.0
      %691 = vmatpush.msra.mxu0 %v674
      %692 = vmatmul.f32.gmra.mxu0 %v626
      %v693 = vpop.f32.mrf.mxu0
      %v694 = vadd.f32 %v578, %v693
      %695 = vmatmul.f32.gmra.mxu0 %v629
      %v696 = vpop.f32.mrf.mxu0
      %v697 = vadd.f32 %v581, %v696
      %698 = vmatmul.f32.gmra.mxu0 %v632
      %v699 = vpop.f32.mrf.mxu0
      %v700 = vadd.f32 %v584, %v699
      %701 = vmatmul.f32.gmra.mxu0 %v635
      %v702 = vpop.f32.mrf.mxu0
      %v703 = vadd.f32 %v587, %v702
      %704 = vmatmul.f32.gmra.mxu0 %v638
      %v705 = vpop.f32.mrf.mxu0
      %v706 = vadd.f32 %v590, %v705
      %707 = vmatmul.f32.gmra.mxu0 %v641
      %v708 = vpop.f32.mrf.mxu0
      %v709 = vadd.f32 %v593, %v708
      %710 = vmatmul.f32.gmra.mxu0 %v644
      %v711 = vpop.f32.mrf.mxu0
      %v712 = vadd.f32 %v596, %v711
      %713 = vmatmul.f32.gmra.mxu0 %v647
      %v714 = vpop.f32.mrf.mxu0
      %v715 = vadd.f32 %v599, %v714
      %716 = vmatmul.f32.gmra.mxu0 %v650
      %v717 = vpop.f32.mrf.mxu0
      %v718 = vadd.f32 %v602, %v717
      %719 = vmatmul.f32.gmra.mxu0 %v653
      %v720 = vpop.f32.mrf.mxu0
      %v721 = vadd.f32 %v605, %v720
      %722 = vmatmul.f32.gmra.mxu0 %v656
      %v723 = vpop.f32.mrf.mxu0
      %v724 = vadd.f32 %v608, %v723
      %725 = vmatmul.f32.gmra.mxu0 %v659
      %v726 = vpop.f32.mrf.mxu0
      %v727 = vadd.f32 %v611, %v726
      %728 = vmatmul.f32.gmra.mxu0 %v662
      %v729 = vpop.f32.mrf.mxu0
      %v730 = vadd.f32 %v614, %v729
      %731 = vmatmul.f32.gmra.mxu0 %v665
      %v732 = vpop.f32.mrf.mxu0
      %v733 = vadd.f32 %v617, %v732
      %734 = vmatmul.f32.gmra.mxu0 %v668
      %v735 = vpop.f32.mrf.mxu0
      %v736 = vadd.f32 %v620, %v735
      %737 = vmatmul.f32.gmra.mxu0 %v671
      %v738 = vpop.f32.mrf.mxu0
      %v739 = vadd.f32 %v623, %v738
      %740 = vdwg.mxu0
      %v741 = vld [vmem:[#allocation2 + $0x2] sm:$0xff]
      %v742 = vld [vmem:[#allocation2 + $0xa] sm:$0xff]
      %v743 = vld [vmem:[#allocation2 + $0x1a] sm:$0xff]
      %v744 = vld [vmem:[#allocation2 + $0x22] sm:$0xff]
      %v745 = vld [vmem:[#allocation2 + $0x32] sm:$0xff]
      %v746 = vld [vmem:[#allocation2 + $0x3a] sm:$0xff]
      %v747 = vld [vmem:[#allocation2 + $0x4a] sm:$0xff]
      %v748 = vld [vmem:[#allocation2 + $0x52] sm:$0xff]
      %v749 = vld [vmem:[#allocation2 + $0x62] sm:$0xff]
      %v750 = vld [vmem:[#allocation2 + $0x6a] sm:$0xff]
      %v751 = vld [vmem:[#allocation2 + $0x7a] sm:$0xff]
      %v752 = vld [vmem:[#allocation2 + $0x82] sm:$0xff]
      %v753 = vld [vmem:[#allocation2 + $0x92] sm:$0xff]
      %v754 = vld [vmem:[#allocation2 + $0x9a] sm:$0xff]
      %v755 = vld [vmem:[#allocation2 + $0xaa] sm:$0xff]
      %v756 = vld [vmem:[#allocation2 + $0xb2] sm:$0xff]
      %s757 = scalar_lea.vmem %s3, 8
      %v758 = vld [vmem:[%s757] sm:$0xf]
      %v760 = vsel %vm410, %v741, 0
      %v763 = vsel %vm410, %v742, 0
      %v766 = vsel %vm410, %v743, 0
      %v769 = vsel %vm410, %v744, 0
      %v772 = vsel %vm410, %v745, 0
      %v775 = vsel %vm410, %v746, 0
      %v778 = vsel %vm410, %v747, 0
      %v781 = vsel %vm410, %v748, 0
      %v784 = vsel %vm410, %v749, 0
      %v787 = vsel %vm410, %v750, 0
      %v790 = vsel %vm410, %v751, 0
      %v793 = vsel %vm410, %v752, 0
      %v796 = vsel %vm410, %v753, 0
      %v799 = vsel %vm410, %v754, 0
      %v802 = vsel %vm410, %v755, 0
      %v805 = vsel %vm410, %v756, 0
      %v808 = vsel %vm556, %v758, 0
      %810 = vmatpush.msra.mxu0 0.0
      %811 = vmatpush.msra.mxu0 0.0
      %812 = vmatpush.msra.mxu0 0.0
      %813 = vmatpush.msra.mxu0 0.0
      %814 = vmatpush.msra.mxu0 0.0
      %815 = vmatpush.msra.mxu0 0.0
      %816 = vmatpush.msra.mxu0 0.0
      %817 = vmatpush.msra.mxu0 0.0
      %818 = vmatpush.msra.mxu0 0.0
      %819 = vmatpush.msra.mxu0 0.0
      %820 = vmatpush.msra.mxu0 0.0
      %821 = vmatpush.msra.mxu0 0.0
      %822 = vmatpush.msra.mxu0 0.0
      %823 = vmatpush.msra.mxu0 0.0
      %824 = vmatpush.msra.mxu0 0.0
      %825 = vmatpush.msra.mxu0 %v808
      %826 = vmatmul.f32.gmra.mxu0 %v760
      %v827 = vpop.f32.mrf.mxu0
      %v828 = vadd.f32 0.0, %v827
      %829 = vmatmul.f32.gmra.mxu0 %v763
      %v830 = vpop.f32.mrf.mxu0
      %v831 = vadd.f32 0.0, %v830
      %832 = vmatmul.f32.gmra.mxu0 %v766
      %v833 = vpop.f32.mrf.mxu0
      %v834 = vadd.f32 0.0, %v833
      %835 = vmatmul.f32.gmra.mxu0 %v769
      %v836 = vpop.f32.mrf.mxu0
      %v837 = vadd.f32 0.0, %v836
      %838 = vmatmul.f32.gmra.mxu0 %v772
      %v839 = vpop.f32.mrf.mxu0
      %v840 = vadd.f32 0.0, %v839
      %841 = vmatmul.f32.gmra.mxu0 %v775
      %v842 = vpop.f32.mrf.mxu0
      %v843 = vadd.f32 0.0, %v842
      %844 = vmatmul.f32.gmra.mxu0 %v778
      %v845 = vpop.f32.mrf.mxu0
      %v846 = vadd.f32 0.0, %v845
      %847 = vmatmul.f32.gmra.mxu0 %v781
      %v848 = vpop.f32.mrf.mxu0
      %v849 = vadd.f32 0.0, %v848
      %850 = vmatmul.f32.gmra.mxu0 %v784
      %v851 = vpop.f32.mrf.mxu0
      %v852 = vadd.f32 0.0, %v851
      %853 = vmatmul.f32.gmra.mxu0 %v787
      %v854 = vpop.f32.mrf.mxu0
      %v855 = vadd.f32 0.0, %v854
      %856 = vmatmul.f32.gmra.mxu0 %v790
      %v857 = vpop.f32.mrf.mxu0
      %v858 = vadd.f32 0.0, %v857
      %859 = vmatmul.f32.gmra.mxu0 %v793
      %v860 = vpop.f32.mrf.mxu0
      %v861 = vadd.f32 0.0, %v860
      %862 = vmatmul.f32.gmra.mxu0 %v796
      %v863 = vpop.f32.mrf.mxu0
      %v864 = vadd.f32 0.0, %v863
      %865 = vmatmul.f32.gmra.mxu0 %v799
      %v866 = vpop.f32.mrf.mxu0
      %v867 = vadd.f32 0.0, %v866
      %868 = vmatmul.f32.gmra.mxu0 %v802
      %v869 = vpop.f32.mrf.mxu0
      %v870 = vadd.f32 0.0, %v869
      %871 = vmatmul.f32.gmra.mxu0 %v805
      %v872 = vpop.f32.mrf.mxu0
      %v873 = vadd.f32 0.0, %v872
      %874 = vdwg.mxu0
      %v875 = vadd.f32 %v694, %v828
      %v876 = vadd.f32 %v697, %v831
      %v877 = vadd.f32 %v700, %v834
      %v878 = vadd.f32 %v703, %v837
      %v879 = vadd.f32 %v706, %v840
      %v880 = vadd.f32 %v709, %v843
      %v881 = vadd.f32 %v712, %v846
      %v882 = vadd.f32 %v715, %v849
      %v883 = vadd.f32 %v718, %v852
      %v884 = vadd.f32 %v721, %v855
      %v885 = vadd.f32 %v724, %v858
      %v886 = vadd.f32 %v727, %v861
      %v887 = vadd.f32 %v730, %v864
      %v888 = vadd.f32 %v733, %v867
      %v889 = vadd.f32 %v736, %v870
      %v890 = vadd.f32 %v739, %v873
      %v891 = vld [vmem:[%s409] sm:$0xff]
      %v892 = vld [vmem:[%s409 + $0x8] sm:$0xff]
      %v893 = vld [vmem:[%s409 + $0x18] sm:$0xff]
      %v894 = vld [vmem:[%s409 + $0x20] sm:$0xff]
      %v895 = vld [vmem:[%s409 + $0x30] sm:$0xff]
      %v896 = vld [vmem:[%s409 + $0x38] sm:$0xff]
      %v897 = vld [vmem:[%s409 + $0x48] sm:$0xff]
      %v898 = vld [vmem:[%s409 + $0x50] sm:$0xff]
      %v899 = vld [vmem:[%s409 + $0x60] sm:$0xff]
      %v900 = vld [vmem:[%s409 + $0x68] sm:$0xff]
      %v901 = vld [vmem:[%s409 + $0x78] sm:$0xff]
      %v902 = vld [vmem:[%s409 + $0x80] sm:$0xff]
      %v903 = vld [vmem:[%s409 + $0x90] sm:$0xff]
      %v904 = vld [vmem:[%s409 + $0x98] sm:$0xff]
      %v905 = vld [vmem:[%s409 + $0xa8] sm:$0xff]
      %v906 = vld [vmem:[%s409 + $0xb0] sm:$0xff]
      %s907 = scalar_lea.vmem %s3, 12
      %v908 = vld [vmem:[%s907] sm:$0xf]
      %v910 = vsel %vm410, %v891, 0
      %v913 = vsel %vm410, %v892, 0
      %v916 = vsel %vm410, %v893, 0
      %v919 = vsel %vm410, %v894, 0
      %v922 = vsel %vm410, %v895, 0
      %v925 = vsel %vm410, %v896, 0
      %v928 = vsel %vm410, %v897, 0
      %v931 = vsel %vm410, %v898, 0
      %v934 = vsel %vm410, %v899, 0
      %v937 = vsel %vm410, %v900, 0
      %v940 = vsel %vm410, %v901, 0
      %v943 = vsel %vm410, %v902, 0
      %v946 = vsel %vm410, %v903, 0
      %v949 = vsel %vm410, %v904, 0
      %v952 = vsel %vm410, %v905, 0
      %v955 = vsel %vm410, %v906, 0
      %v958 = vsel %vm556, %v908, 0
      %960 = vmatpush.msra.mxu0 0.0
      %961 = vmatpush.msra.mxu0 0.0
      %962 = vmatpush.msra.mxu0 0.0
      %963 = vmatpush.msra.mxu0 0.0
      %964 = vmatpush.msra.mxu0 0.0
      %965 = vmatpush.msra.mxu0 0.0
      %966 = vmatpush.msra.mxu0 0.0
      %967 = vmatpush.msra.mxu0 0.0
      %968 = vmatpush.msra.mxu0 0.0
      %969 = vmatpush.msra.mxu0 0.0
      %970 = vmatpush.msra.mxu0 0.0
      %971 = vmatpush.msra.mxu0 0.0
      %972 = vmatpush.msra.mxu0 0.0
      %973 = vmatpush.msra.mxu0 0.0
      %974 = vmatpush.msra.mxu0 0.0
      %975 = vmatpush.msra.mxu0 %v958
      %976 = vmatmul.f32.gmra.mxu0 %v910
      %v977 = vpop.f32.mrf.mxu0
      %v978 = vadd.f32 0.0, %v977
      %979 = vmatmul.f32.gmra.mxu0 %v913
      %v980 = vpop.f32.mrf.mxu0
      %v981 = vadd.f32 0.0, %v980
      %982 = vmatmul.f32.gmra.mxu0 %v916
      %v983 = vpop.f32.mrf.mxu0
      %v984 = vadd.f32 0.0, %v983
      %985 = vmatmul.f32.gmra.mxu0 %v919
      %v986 = vpop.f32.mrf.mxu0
      %v987 = vadd.f32 0.0, %v986
      %988 = vmatmul.f32.gmra.mxu0 %v922
      %v989 = vpop.f32.mrf.mxu0
      %v990 = vadd.f32 0.0, %v989
      %991 = vmatmul.f32.gmra.mxu0 %v925
      %v992 = vpop.f32.mrf.mxu0
      %v993 = vadd.f32 0.0, %v992
      %994 = vmatmul.f32.gmra.mxu0 %v928
      %v995 = vpop.f32.mrf.mxu0
      %v996 = vadd.f32 0.0, %v995
      %997 = vmatmul.f32.gmra.mxu0 %v931
      %v998 = vpop.f32.mrf.mxu0
      %v999 = vadd.f32 0.0, %v998
      %1000 = vmatmul.f32.gmra.mxu0 %v934
      %v1001 = vpop.f32.mrf.mxu0
      %v1002 = vadd.f32 0.0, %v1001
      %1003 = vmatmul.f32.gmra.mxu0 %v937
      %v1004 = vpop.f32.mrf.mxu0
      %v1005 = vadd.f32 0.0, %v1004
      %1006 = vmatmul.f32.gmra.mxu0 %v940
      %v1007 = vpop.f32.mrf.mxu0
      %v1008 = vadd.f32 0.0, %v1007
      %1009 = vmatmul.f32.gmra.mxu0 %v943
      %v1010 = vpop.f32.mrf.mxu0
      %v1011 = vadd.f32 0.0, %v1010
      %1012 = vmatmul.f32.gmra.mxu0 %v946
      %v1013 = vpop.f32.mrf.mxu0
      %v1014 = vadd.f32 0.0, %v1013
      %1015 = vmatmul.f32.gmra.mxu0 %v949
      %v1016 = vpop.f32.mrf.mxu0
      %v1017 = vadd.f32 0.0, %v1016
      %1018 = vmatmul.f32.gmra.mxu0 %v952
      %v1019 = vpop.f32.mrf.mxu0
      %v1020 = vadd.f32 0.0, %v1019
      %1021 = vmatmul.f32.gmra.mxu0 %v955
      %v1022 = vpop.f32.mrf.mxu0
      %v1023 = vadd.f32 0.0, %v1022
      %1024 = vdwg.mxu0
      %v1025 = vadd.f32 %v875, %v978
      %v1026 = vadd.f32 %v876, %v981
      %v1027 = vadd.f32 %v877, %v984
      %v1028 = vadd.f32 %v878, %v987
      %v1029 = vadd.f32 %v879, %v990
      %v1030 = vadd.f32 %v880, %v993
      %v1031 = vadd.f32 %v881, %v996
      %v1032 = vadd.f32 %v882, %v999
      %v1033 = vadd.f32 %v883, %v1002
      %v1034 = vadd.f32 %v884, %v1005
      %v1035 = vadd.f32 %v885, %v1008
      %v1036 = vadd.f32 %v886, %v1011
      %v1037 = vadd.f32 %v887, %v1014
      %v1038 = vadd.f32 %v888, %v1017
      %v1039 = vadd.f32 %v889, %v1020
      %v1040 = vadd.f32 %v890, %v1023
      %v1041 = vld [vmem:[%s409 + $0x1] sm:$0xff]
      %v1042 = vld [vmem:[%s409 + $0x9] sm:$0xff]
      %v1043 = vld [vmem:[%s409 + $0x19] sm:$0xff]
      %v1044 = vld [vmem:[%s409 + $0x21] sm:$0xff]
      %v1045 = vld [vmem:[%s409 + $0x31] sm:$0xff]
      %v1046 = vld [vmem:[%s409 + $0x39] sm:$0xff]
      %v1047 = vld [vmem:[%s409 + $0x49] sm:$0xff]
      %v1048 = vld [vmem:[%s409 + $0x51] sm:$0xff]
      %v1049 = vld [vmem:[%s409 + $0x61] sm:$0xff]
      %v1050 = vld [vmem:[%s409 + $0x69] sm:$0xff]
      %v1051 = vld [vmem:[%s409 + $0x79] sm:$0xff]
      %v1052 = vld [vmem:[%s409 + $0x81] sm:$0xff]
      %v1053 = vld [vmem:[%s409 + $0x91] sm:$0xff]
      %v1054 = vld [vmem:[%s409 + $0x99] sm:$0xff]
      %v1055 = vld [vmem:[%s409 + $0xa9] sm:$0xff]
      %v1056 = vld [vmem:[%s409 + $0xb1] sm:$0xff]
      %s1057 = scalar_lea.vmem %s3, 16
      %v1058 = vld [vmem:[%s1057] sm:$0xf]
      %v1060 = vsel %vm410, %v1041, 0
      %v1063 = vsel %vm410, %v1042, 0
      %v1066 = vsel %vm410, %v1043, 0
      %v1069 = vsel %vm410, %v1044, 0
      %v1072 = vsel %vm410, %v1045, 0
      %v1075 = vsel %vm410, %v1046, 0
      %v1078 = vsel %vm410, %v1047, 0
      %v1081 = vsel %vm410, %v1048, 0
      %v1084 = vsel %vm410, %v1049, 0
      %v1087 = vsel %vm410, %v1050, 0
      %v1090 = vsel %vm410, %v1051, 0
      %v1093 = vsel %vm410, %v1052, 0
      %v1096 = vsel %vm410, %v1053, 0
      %v1099 = vsel %vm410, %v1054, 0
      %v1102 = vsel %vm410, %v1055, 0
      %v1105 = vsel %vm410, %v1056, 0
      %v1108 = vsel %vm556, %v1058, 0
      %1110 = vmatpush.msra.mxu0 0.0
      %1111 = vmatpush.msra.mxu0 0.0
      %1112 = vmatpush.msra.mxu0 0.0
      %1113 = vmatpush.msra.mxu0 0.0
      %1114 = vmatpush.msra.mxu0 0.0
      %1115 = vmatpush.msra.mxu0 0.0
      %1116 = vmatpush.msra.mxu0 0.0
      %1117 = vmatpush.msra.mxu0 0.0
      %1118 = vmatpush.msra.mxu0 0.0
      %1119 = vmatpush.msra.mxu0 0.0
      %1120 = vmatpush.msra.mxu0 0.0
      %1121 = vmatpush.msra.mxu0 0.0
      %1122 = vmatpush.msra.mxu0 0.0
      %1123 = vmatpush.msra.mxu0 0.0
      %1124 = vmatpush.msra.mxu0 0.0
      %1125 = vmatpush.msra.mxu0 %v1108
      %1126 = vmatmul.f32.gmra.mxu0 %v1060
      %v1127 = vpop.f32.mrf.mxu0
      %v1128 = vadd.f32 0.0, %v1127
      %1129 = vmatmul.f32.gmra.mxu0 %v1063
      %v1130 = vpop.f32.mrf.mxu0
      %v1131 = vadd.f32 0.0, %v1130
      %1132 = vmatmul.f32.gmra.mxu0 %v1066
      %v1133 = vpop.f32.mrf.mxu0
      %v1134 = vadd.f32 0.0, %v1133
      %1135 = vmatmul.f32.gmra.mxu0 %v1069
      %v1136 = vpop.f32.mrf.mxu0
      %v1137 = vadd.f32 0.0, %v1136
      %1138 = vmatmul.f32.gmra.mxu0 %v1072
      %v1139 = vpop.f32.mrf.mxu0
      %v1140 = vadd.f32 0.0, %v1139
      %1141 = vmatmul.f32.gmra.mxu0 %v1075
      %v1142 = vpop.f32.mrf.mxu0
      %v1143 = vadd.f32 0.0, %v1142
      %1144 = vmatmul.f32.gmra.mxu0 %v1078
      %v1145 = vpop.f32.mrf.mxu0
      %v1146 = vadd.f32 0.0, %v1145
      %1147 = vmatmul.f32.gmra.mxu0 %v1081
      %v1148 = vpop.f32.mrf.mxu0
      %v1149 = vadd.f32 0.0, %v1148
      %1150 = vmatmul.f32.gmra.mxu0 %v1084
      %v1151 = vpop.f32.mrf.mxu0
      %v1152 = vadd.f32 0.0, %v1151
      %1153 = vmatmul.f32.gmra.mxu0 %v1087
      %v1154 = vpop.f32.mrf.mxu0
      %v1155 = vadd.f32 0.0, %v1154
      %1156 = vmatmul.f32.gmra.mxu0 %v1090
      %v1157 = vpop.f32.mrf.mxu0
      %v1158 = vadd.f32 0.0, %v1157
      %1159 = vmatmul.f32.gmra.mxu0 %v1093
      %v1160 = vpop.f32.mrf.mxu0
      %v1161 = vadd.f32 0.0, %v1160
      %1162 = vmatmul.f32.gmra.mxu0 %v1096
      %v1163 = vpop.f32.mrf.mxu0
      %v1164 = vadd.f32 0.0, %v1163
      %1165 = vmatmul.f32.gmra.mxu0 %v1099
      %v1166 = vpop.f32.mrf.mxu0
      %v1167 = vadd.f32 0.0, %v1166
      %1168 = vmatmul.f32.gmra.mxu0 %v1102
      %v1169 = vpop.f32.mrf.mxu0
      %v1170 = vadd.f32 0.0, %v1169
      %1171 = vmatmul.f32.gmra.mxu0 %v1105
      %v1172 = vpop.f32.mrf.mxu0
      %v1173 = vadd.f32 0.0, %v1172
      %1174 = vdwg.mxu0
      %v1175 = vadd.f32 %v1025, %v1128
      %v1176 = vadd.f32 %v1026, %v1131
      %v1177 = vadd.f32 %v1027, %v1134
      %v1178 = vadd.f32 %v1028, %v1137
      %v1179 = vadd.f32 %v1029, %v1140
      %v1180 = vadd.f32 %v1030, %v1143
      %v1181 = vadd.f32 %v1031, %v1146
      %v1182 = vadd.f32 %v1032, %v1149
      %v1183 = vadd.f32 %v1033, %v1152
      %v1184 = vadd.f32 %v1034, %v1155
      %v1185 = vadd.f32 %v1035, %v1158
      %v1186 = vadd.f32 %v1036, %v1161
      %v1187 = vadd.f32 %v1037, %v1164
      %v1188 = vadd.f32 %v1038, %v1167
      %v1189 = vadd.f32 %v1039, %v1170
      %v1190 = vadd.f32 %v1040, %v1173
      %v1191 = vld [vmem:[%s409 + $0x2] sm:$0xff]
      %v1192 = vld [vmem:[%s409 + $0xa] sm:$0xff]
      %v1193 = vld [vmem:[%s409 + $0x1a] sm:$0xff]
      %v1194 = vld [vmem:[%s409 + $0x22] sm:$0xff]
      %v1195 = vld [vmem:[%s409 + $0x32] sm:$0xff]
      %v1196 = vld [vmem:[%s409 + $0x3a] sm:$0xff]
      %v1197 = vld [vmem:[%s409 + $0x4a] sm:$0xff]
      %v1198 = vld [vmem:[%s409 + $0x52] sm:$0xff]
      %v1199 = vld [vmem:[%s409 + $0x62] sm:$0xff]
      %v1200 = vld [vmem:[%s409 + $0x6a] sm:$0xff]
      %v1201 = vld [vmem:[%s409 + $0x7a] sm:$0xff]
      %v1202 = vld [vmem:[%s409 + $0x82] sm:$0xff]
      %v1203 = vld [vmem:[%s409 + $0x92] sm:$0xff]
      %v1204 = vld [vmem:[%s409 + $0x9a] sm:$0xff]
      %v1205 = vld [vmem:[%s409 + $0xaa] sm:$0xff]
      %v1206 = vld [vmem:[%s409 + $0xb2] sm:$0xff]
      %s1207 = scalar_lea.vmem %s3, 20
      %v1208 = vld [vmem:[%s1207] sm:$0xf]
      %v1210 = vsel %vm410, %v1191, 0
      %v1213 = vsel %vm410, %v1192, 0
      %v1216 = vsel %vm410, %v1193, 0
      %v1219 = vsel %vm410, %v1194, 0
      %v1222 = vsel %vm410, %v1195, 0
      %v1225 = vsel %vm410, %v1196, 0
      %v1228 = vsel %vm410, %v1197, 0
      %v1231 = vsel %vm410, %v1198, 0
      %v1234 = vsel %vm410, %v1199, 0
      %v1237 = vsel %vm410, %v1200, 0
      %v1240 = vsel %vm410, %v1201, 0
      %v1243 = vsel %vm410, %v1202, 0
      %v1246 = vsel %vm410, %v1203, 0
      %v1249 = vsel %vm410, %v1204, 0
      %v1252 = vsel %vm410, %v1205, 0
      %v1255 = vsel %vm410, %v1206, 0
      %v1258 = vsel %vm556, %v1208, 0
      %1260 = vmatpush.msra.mxu0 0.0
      %1261 = vmatpush.msra.mxu0 0.0
      %1262 = vmatpush.msra.mxu0 0.0
      %1263 = vmatpush.msra.mxu0 0.0
      %1264 = vmatpush.msra.mxu0 0.0
      %1265 = vmatpush.msra.mxu0 0.0
      %1266 = vmatpush.msra.mxu0 0.0
      %1267 = vmatpush.msra.mxu0 0.0
      %1268 = vmatpush.msra.mxu0 0.0
      %1269 = vmatpush.msra.mxu0 0.0
      %1270 = vmatpush.msra.mxu0 0.0
      %1271 = vmatpush.msra.mxu0 0.0
      %1272 = vmatpush.msra.mxu0 0.0
      %1273 = vmatpush.msra.mxu0 0.0
      %1274 = vmatpush.msra.mxu0 0.0
      %1275 = vmatpush.msra.mxu0 %v1258
      %1276 = vmatmul.f32.gmra.mxu0 %v1210
      %v1277 = vpop.f32.mrf.mxu0
      %v1278 = vadd.f32 0.0, %v1277
      %1279 = vmatmul.f32.gmra.mxu0 %v1213
      %v1280 = vpop.f32.mrf.mxu0
      %v1281 = vadd.f32 0.0, %v1280
      %1282 = vmatmul.f32.gmra.mxu0 %v1216
      %v1283 = vpop.f32.mrf.mxu0
      %v1284 = vadd.f32 0.0, %v1283
      %1285 = vmatmul.f32.gmra.mxu0 %v1219
      %v1286 = vpop.f32.mrf.mxu0
      %v1287 = vadd.f32 0.0, %v1286
      %1288 = vmatmul.f32.gmra.mxu0 %v1222
      %v1289 = vpop.f32.mrf.mxu0
      %v1290 = vadd.f32 0.0, %v1289
      %1291 = vmatmul.f32.gmra.mxu0 %v1225
      %v1292 = vpop.f32.mrf.mxu0
      %v1293 = vadd.f32 0.0, %v1292
      %1294 = vmatmul.f32.gmra.mxu0 %v1228
      %v1295 = vpop.f32.mrf.mxu0
      %v1296 = vadd.f32 0.0, %v1295
      %1297 = vmatmul.f32.gmra.mxu0 %v1231
      %v1298 = vpop.f32.mrf.mxu0
      %v1299 = vadd.f32 0.0, %v1298
      %1300 = vmatmul.f32.gmra.mxu0 %v1234
      %v1301 = vpop.f32.mrf.mxu0
      %v1302 = vadd.f32 0.0, %v1301
      %1303 = vmatmul.f32.gmra.mxu0 %v1237
      %v1304 = vpop.f32.mrf.mxu0
      %v1305 = vadd.f32 0.0, %v1304
      %1306 = vmatmul.f32.gmra.mxu0 %v1240
      %v1307 = vpop.f32.mrf.mxu0
      %v1308 = vadd.f32 0.0, %v1307
      %1309 = vmatmul.f32.gmra.mxu0 %v1243
      %v1310 = vpop.f32.mrf.mxu0
      %v1311 = vadd.f32 0.0, %v1310
      %1312 = vmatmul.f32.gmra.mxu0 %v1246
      %v1313 = vpop.f32.mrf.mxu0
      %v1314 = vadd.f32 0.0, %v1313
      %1315 = vmatmul.f32.gmra.mxu0 %v1249
      %v1316 = vpop.f32.mrf.mxu0
      %v1317 = vadd.f32 0.0, %v1316
      %1318 = vmatmul.f32.gmra.mxu0 %v1252
      %v1319 = vpop.f32.mrf.mxu0
      %v1320 = vadd.f32 0.0, %v1319
      %1321 = vmatmul.f32.gmra.mxu0 %v1255
      %v1322 = vpop.f32.mrf.mxu0
      %v1323 = vadd.f32 0.0, %v1322
      %1324 = vdwg.mxu0
      %v1325 = vadd.f32 %v1175, %v1278
      %v1326 = vadd.f32 %v1176, %v1281
      %v1327 = vadd.f32 %v1177, %v1284
      %v1328 = vadd.f32 %v1178, %v1287
      %v1329 = vadd.f32 %v1179, %v1290
      %v1330 = vadd.f32 %v1180, %v1293
      %v1331 = vadd.f32 %v1181, %v1296
      %v1332 = vadd.f32 %v1182, %v1299
      %v1333 = vadd.f32 %v1183, %v1302
      %v1334 = vadd.f32 %v1184, %v1305
      %v1335 = vadd.f32 %v1185, %v1308
      %v1336 = vadd.f32 %v1186, %v1311
      %v1337 = vadd.f32 %v1187, %v1314
      %v1338 = vadd.f32 %v1188, %v1317
      %v1339 = vadd.f32 %v1189, %v1320
      %v1340 = vadd.f32 %v1190, %v1323
      %s1341 = scalar_lea.vmem [#allocation2], 48
      %v1342 = vld [vmem:[%s1341] sm:$0xff]
      %v1343 = vld [vmem:[%s1341 + $0x8] sm:$0xff]
      %v1344 = vld [vmem:[%s1341 + $0x18] sm:$0xff]
      %v1345 = vld [vmem:[%s1341 + $0x20] sm:$0xff]
      %v1346 = vld [vmem:[%s1341 + $0x30] sm:$0xff]
      %v1347 = vld [vmem:[%s1341 + $0x38] sm:$0xff]
      %v1348 = vld [vmem:[%s1341 + $0x48] sm:$0xff]
      %v1349 = vld [vmem:[%s1341 + $0x50] sm:$0xff]
      %v1350 = vld [vmem:[%s1341 + $0x60] sm:$0xff]
      %v1351 = vld [vmem:[%s1341 + $0x68] sm:$0xff]
      %v1352 = vld [vmem:[%s1341 + $0x78] sm:$0xff]
      %v1353 = vld [vmem:[%s1341 + $0x80] sm:$0xff]
      %v1354 = vld [vmem:[%s1341 + $0x90] sm:$0xff]
      %v1355 = vld [vmem:[%s1341 + $0x98] sm:$0xff]
      %v1356 = vld [vmem:[%s1341 + $0xa8] sm:$0xff]
      %v1357 = vld [vmem:[%s1341 + $0xb0] sm:$0xff]
      %s1358 = scalar_lea.vmem %s3, 24
      %v1359 = vld [vmem:[%s1358] sm:$0xf]
      %v1361 = vsel %vm410, %v1342, 0
      %v1364 = vsel %vm410, %v1343, 0
      %v1367 = vsel %vm410, %v1344, 0
      %v1370 = vsel %vm410, %v1345, 0
      %v1373 = vsel %vm410, %v1346, 0
      %v1376 = vsel %vm410, %v1347, 0
      %v1379 = vsel %vm410, %v1348, 0
      %v1382 = vsel %vm410, %v1349, 0
      %v1385 = vsel %vm410, %v1350, 0
      %v1388 = vsel %vm410, %v1351, 0
      %v1391 = vsel %vm410, %v1352, 0
      %v1394 = vsel %vm410, %v1353, 0
      %v1397 = vsel %vm410, %v1354, 0
      %v1400 = vsel %vm410, %v1355, 0
      %v1403 = vsel %vm410, %v1356, 0
      %v1406 = vsel %vm410, %v1357, 0
      %v1409 = vsel %vm556, %v1359, 0
      %1411 = vmatpush.msra.mxu0 0.0
      %1412 = vmatpush.msra.mxu0 0.0
      %1413 = vmatpush.msra.mxu0 0.0
      %1414 = vmatpush.msra.mxu0 0.0
      %1415 = vmatpush.msra.mxu0 0.0
      %1416 = vmatpush.msra.mxu0 0.0
      %1417 = vmatpush.msra.mxu0 0.0
      %1418 = vmatpush.msra.mxu0 0.0
      %1419 = vmatpush.msra.mxu0 0.0
      %1420 = vmatpush.msra.mxu0 0.0
      %1421 = vmatpush.msra.mxu0 0.0
      %1422 = vmatpush.msra.mxu0 0.0
      %1423 = vmatpush.msra.mxu0 0.0
      %1424 = vmatpush.msra.mxu0 0.0
      %1425 = vmatpush.msra.mxu0 0.0
      %1426 = vmatpush.msra.mxu0 %v1409
      %1427 = vmatmul.f32.gmra.mxu0 %v1361
      %v1428 = vpop.f32.mrf.mxu0
      %v1429 = vadd.f32 0.0, %v1428
      %1430 = vmatmul.f32.gmra.mxu0 %v1364
      %v1431 = vpop.f32.mrf.mxu0
      %v1432 = vadd.f32 0.0, %v1431
      %1433 = vmatmul.f32.gmra.mxu0 %v1367
      %v1434 = vpop.f32.mrf.mxu0
      %v1435 = vadd.f32 0.0, %v1434
      %1436 = vmatmul.f32.gmra.mxu0 %v1370
      %v1437 = vpop.f32.mrf.mxu0
      %v1438 = vadd.f32 0.0, %v1437
      %1439 = vmatmul.f32.gmra.mxu0 %v1373
      %v1440 = vpop.f32.mrf.mxu0
      %v1441 = vadd.f32 0.0, %v1440
      %1442 = vmatmul.f32.gmra.mxu0 %v1376
      %v1443 = vpop.f32.mrf.mxu0
      %v1444 = vadd.f32 0.0, %v1443
      %1445 = vmatmul.f32.gmra.mxu0 %v1379
      %v1446 = vpop.f32.mrf.mxu0
      %v1447 = vadd.f32 0.0, %v1446
      %1448 = vmatmul.f32.gmra.mxu0 %v1382
      %v1449 = vpop.f32.mrf.mxu0
      %v1450 = vadd.f32 0.0, %v1449
      %1451 = vmatmul.f32.gmra.mxu0 %v1385
      %v1452 = vpop.f32.mrf.mxu0
      %v1453 = vadd.f32 0.0, %v1452
      %1454 = vmatmul.f32.gmra.mxu0 %v1388
      %v1455 = vpop.f32.mrf.mxu0
      %v1456 = vadd.f32 0.0, %v1455
      %1457 = vmatmul.f32.gmra.mxu0 %v1391
      %v1458 = vpop.f32.mrf.mxu0
      %v1459 = vadd.f32 0.0, %v1458
      %1460 = vmatmul.f32.gmra.mxu0 %v1394
      %v1461 = vpop.f32.mrf.mxu0
      %v1462 = vadd.f32 0.0, %v1461
      %1463 = vmatmul.f32.gmra.mxu0 %v1397
      %v1464 = vpop.f32.mrf.mxu0
      %v1465 = vadd.f32 0.0, %v1464
      %1466 = vmatmul.f32.gmra.mxu0 %v1400
      %v1467 = vpop.f32.mrf.mxu0
      %v1468 = vadd.f32 0.0, %v1467
      %1469 = vmatmul.f32.gmra.mxu0 %v1403
      %v1470 = vpop.f32.mrf.mxu0
      %v1471 = vadd.f32 0.0, %v1470
      %1472 = vmatmul.f32.gmra.mxu0 %v1406
      %v1473 = vpop.f32.mrf.mxu0
      %v1474 = vadd.f32 0.0, %v1473
      %1475 = vdwg.mxu0
      %v1476 = vadd.f32 %v1325, %v1429
      %v1477 = vadd.f32 %v1326, %v1432
      %v1478 = vadd.f32 %v1327, %v1435
      %v1479 = vadd.f32 %v1328, %v1438
      %v1480 = vadd.f32 %v1329, %v1441
      %v1481 = vadd.f32 %v1330, %v1444
      %v1482 = vadd.f32 %v1331, %v1447
      %v1483 = vadd.f32 %v1332, %v1450
      %v1484 = vadd.f32 %v1333, %v1453
      %v1485 = vadd.f32 %v1334, %v1456
      %v1486 = vadd.f32 %v1335, %v1459
      %v1487 = vadd.f32 %v1336, %v1462
      %v1488 = vadd.f32 %v1337, %v1465
      %v1489 = vadd.f32 %v1338, %v1468
      %v1490 = vadd.f32 %v1339, %v1471
      %v1491 = vadd.f32 %v1340, %v1474
      %v1492 = vld [vmem:[%s1341 + $0x1] sm:$0xff]
      %v1493 = vld [vmem:[%s1341 + $0x9] sm:$0xff]
      %v1494 = vld [vmem:[%s1341 + $0x19] sm:$0xff]
      %v1495 = vld [vmem:[%s1341 + $0x21] sm:$0xff]
      %v1496 = vld [vmem:[%s1341 + $0x31] sm:$0xff]
      %v1497 = vld [vmem:[%s1341 + $0x39] sm:$0xff]
      %v1498 = vld [vmem:[%s1341 + $0x49] sm:$0xff]
      %v1499 = vld [vmem:[%s1341 + $0x51] sm:$0xff]
      %v1500 = vld [vmem:[%s1341 + $0x61] sm:$0xff]
      %v1501 = vld [vmem:[%s1341 + $0x69] sm:$0xff]
      %v1502 = vld [vmem:[%s1341 + $0x79] sm:$0xff]
      %v1503 = vld [vmem:[%s1341 + $0x81] sm:$0xff]
      %v1504 = vld [vmem:[%s1341 + $0x91] sm:$0xff]
      %v1505 = vld [vmem:[%s1341 + $0x99] sm:$0xff]
      %v1506 = vld [vmem:[%s1341 + $0xa9] sm:$0xff]
      %v1507 = vld [vmem:[%s1341 + $0xb1] sm:$0xff]
      %s1508 = scalar_lea.vmem %s3, 28
      %v1509 = vld [vmem:[%s1508] sm:$0xf]
      %v1511 = vsel %vm410, %v1492, 0
      %v1514 = vsel %vm410, %v1493, 0
      %v1517 = vsel %vm410, %v1494, 0
      %v1520 = vsel %vm410, %v1495, 0
      %v1523 = vsel %vm410, %v1496, 0
      %v1526 = vsel %vm410, %v1497, 0
      %v1529 = vsel %vm410, %v1498, 0
      %v1532 = vsel %vm410, %v1499, 0
      %v1535 = vsel %vm410, %v1500, 0
      %v1538 = vsel %vm410, %v1501, 0
      %v1541 = vsel %vm410, %v1502, 0
      %v1544 = vsel %vm410, %v1503, 0
      %v1547 = vsel %vm410, %v1504, 0
      %v1550 = vsel %vm410, %v1505, 0
      %v1553 = vsel %vm410, %v1506, 0
      %v1556 = vsel %vm410, %v1507, 0
      %v1559 = vsel %vm556, %v1509, 0
      %1561 = vmatpush.msra.mxu0 0.0
      %1562 = vmatpush.msra.mxu0 0.0
      %1563 = vmatpush.msra.mxu0 0.0
      %1564 = vmatpush.msra.mxu0 0.0
      %1565 = vmatpush.msra.mxu0 0.0
      %1566 = vmatpush.msra.mxu0 0.0
      %1567 = vmatpush.msra.mxu0 0.0
      %1568 = vmatpush.msra.mxu0 0.0
      %1569 = vmatpush.msra.mxu0 0.0
      %1570 = vmatpush.msra.mxu0 0.0
      %1571 = vmatpush.msra.mxu0 0.0
      %1572 = vmatpush.msra.mxu0 0.0
      %1573 = vmatpush.msra.mxu0 0.0
      %1574 = vmatpush.msra.mxu0 0.0
      %1575 = vmatpush.msra.mxu0 0.0
      %1576 = vmatpush.msra.mxu0 %v1559
      %1577 = vmatmul.f32.gmra.mxu0 %v1511
      %v1578 = vpop.f32.mrf.mxu0
      %v1579 = vadd.f32 0.0, %v1578
      %1580 = vmatmul.f32.gmra.mxu0 %v1514
      %v1581 = vpop.f32.mrf.mxu0
      %v1582 = vadd.f32 0.0, %v1581
      %1583 = vmatmul.f32.gmra.mxu0 %v1517
      %v1584 = vpop.f32.mrf.mxu0
      %v1585 = vadd.f32 0.0, %v1584
      %1586 = vmatmul.f32.gmra.mxu0 %v1520
      %v1587 = vpop.f32.mrf.mxu0
      %v1588 = vadd.f32 0.0, %v1587
      %1589 = vmatmul.f32.gmra.mxu0 %v1523
      %v1590 = vpop.f32.mrf.mxu0
      %v1591 = vadd.f32 0.0, %v1590
      %1592 = vmatmul.f32.gmra.mxu0 %v1526
      %v1593 = vpop.f32.mrf.mxu0
      %v1594 = vadd.f32 0.0, %v1593
      %1595 = vmatmul.f32.gmra.mxu0 %v1529
      %v1596 = vpop.f32.mrf.mxu0
      %v1597 = vadd.f32 0.0, %v1596
      %1598 = vmatmul.f32.gmra.mxu0 %v1532
      %v1599 = vpop.f32.mrf.mxu0
      %v1600 = vadd.f32 0.0, %v1599
      %1601 = vmatmul.f32.gmra.mxu0 %v1535
      %v1602 = vpop.f32.mrf.mxu0
      %v1603 = vadd.f32 0.0, %v1602
      %1604 = vmatmul.f32.gmra.mxu0 %v1538
      %v1605 = vpop.f32.mrf.mxu0
      %v1606 = vadd.f32 0.0, %v1605
      %1607 = vmatmul.f32.gmra.mxu0 %v1541
      %v1608 = vpop.f32.mrf.mxu0
      %v1609 = vadd.f32 0.0, %v1608
      %1610 = vmatmul.f32.gmra.mxu0 %v1544
      %v1611 = vpop.f32.mrf.mxu0
      %v1612 = vadd.f32 0.0, %v1611
      %1613 = vmatmul.f32.gmra.mxu0 %v1547
      %v1614 = vpop.f32.mrf.mxu0
      %v1615 = vadd.f32 0.0, %v1614
      %1616 = vmatmul.f32.gmra.mxu0 %v1550
      %v1617 = vpop.f32.mrf.mxu0
      %v1618 = vadd.f32 0.0, %v1617
      %1619 = vmatmul.f32.gmra.mxu0 %v1553
      %v1620 = vpop.f32.mrf.mxu0
      %v1621 = vadd.f32 0.0, %v1620
      %1622 = vmatmul.f32.gmra.mxu0 %v1556
      %v1623 = vpop.f32.mrf.mxu0
      %v1624 = vadd.f32 0.0, %v1623
      %1625 = vdwg.mxu0
      %v1626 = vadd.f32 %v1476, %v1579
      %v1627 = vadd.f32 %v1477, %v1582
      %v1628 = vadd.f32 %v1478, %v1585
      %v1629 = vadd.f32 %v1479, %v1588
      %v1630 = vadd.f32 %v1480, %v1591
      %v1631 = vadd.f32 %v1481, %v1594
      %v1632 = vadd.f32 %v1482, %v1597
      %v1633 = vadd.f32 %v1483, %v1600
      %v1634 = vadd.f32 %v1484, %v1603
      %v1635 = vadd.f32 %v1485, %v1606
      %v1636 = vadd.f32 %v1486, %v1609
      %v1637 = vadd.f32 %v1487, %v1612
      %v1638 = vadd.f32 %v1488, %v1615
      %v1639 = vadd.f32 %v1489, %v1618
      %v1640 = vadd.f32 %v1490, %v1621
      %v1641 = vadd.f32 %v1491, %v1624
      %v1642 = vld [vmem:[%s1341 + $0x2] sm:$0xff]
      %v1643 = vld [vmem:[%s1341 + $0xa] sm:$0xff]
      %v1644 = vld [vmem:[%s1341 + $0x1a] sm:$0xff]
      %v1645 = vld [vmem:[%s1341 + $0x22] sm:$0xff]
      %v1646 = vld [vmem:[%s1341 + $0x32] sm:$0xff]
      %v1647 = vld [vmem:[%s1341 + $0x3a] sm:$0xff]
      %v1648 = vld [vmem:[%s1341 + $0x4a] sm:$0xff]
      %v1649 = vld [vmem:[%s1341 + $0x52] sm:$0xff]
      %v1650 = vld [vmem:[%s1341 + $0x62] sm:$0xff]
      %v1651 = vld [vmem:[%s1341 + $0x6a] sm:$0xff]
      %v1652 = vld [vmem:[%s1341 + $0x7a] sm:$0xff]
      %v1653 = vld [vmem:[%s1341 + $0x82] sm:$0xff]
      %v1654 = vld [vmem:[%s1341 + $0x92] sm:$0xff]
      %v1655 = vld [vmem:[%s1341 + $0x9a] sm:$0xff]
      %v1656 = vld [vmem:[%s1341 + $0xaa] sm:$0xff]
      %v1657 = vld [vmem:[%s1341 + $0xb2] sm:$0xff]
      %s1658 = scalar_lea.vmem %s3, 32
      %v1659 = vld [vmem:[%s1658] sm:$0xf]
      %v1661 = vsel %vm410, %v1642, 0
      %v1664 = vsel %vm410, %v1643, 0
      %v1667 = vsel %vm410, %v1644, 0
      %v1670 = vsel %vm410, %v1645, 0
      %v1673 = vsel %vm410, %v1646, 0
      %v1676 = vsel %vm410, %v1647, 0
      %v1679 = vsel %vm410, %v1648, 0
      %v1682 = vsel %vm410, %v1649, 0
      %v1685 = vsel %vm410, %v1650, 0
      %v1688 = vsel %vm410, %v1651, 0
      %v1691 = vsel %vm410, %v1652, 0
      %v1694 = vsel %vm410, %v1653, 0
      %v1697 = vsel %vm410, %v1654, 0
      %v1700 = vsel %vm410, %v1655, 0
      %v1703 = vsel %vm410, %v1656, 0
      %v1706 = vsel %vm410, %v1657, 0
      %v1709 = vsel %vm556, %v1659, 0
      %1711 = vmatpush.msra.mxu0 0.0
      %1712 = vmatpush.msra.mxu0 0.0
      %1713 = vmatpush.msra.mxu0 0.0
      %1714 = vmatpush.msra.mxu0 0.0
      %1715 = vmatpush.msra.mxu0 0.0
      %1716 = vmatpush.msra.mxu0 0.0
      %1717 = vmatpush.msra.mxu0 0.0
      %1718 = vmatpush.msra.mxu0 0.0
      %1719 = vmatpush.msra.mxu0 0.0
      %1720 = vmatpush.msra.mxu0 0.0
      %1721 = vmatpush.msra.mxu0 0.0
      %1722 = vmatpush.msra.mxu0 0.0
      %1723 = vmatpush.msra.mxu0 0.0
      %1724 = vmatpush.msra.mxu0 0.0
      %1725 = vmatpush.msra.mxu0 0.0
      %1726 = vmatpush.msra.mxu0 %v1709
      %1727 = vmatmul.f32.gmra.mxu0 %v1661
      %v1728 = vpop.f32.mrf.mxu0
      %v1729 = vadd.f32 0.0, %v1728
      %1730 = vmatmul.f32.gmra.mxu0 %v1664
      %v1731 = vpop.f32.mrf.mxu0
      %v1732 = vadd.f32 0.0, %v1731
      %1733 = vmatmul.f32.gmra.mxu0 %v1667
      %v1734 = vpop.f32.mrf.mxu0
      %v1735 = vadd.f32 0.0, %v1734
      %1736 = vmatmul.f32.gmra.mxu0 %v1670
      %v1737 = vpop.f32.mrf.mxu0
      %v1738 = vadd.f32 0.0, %v1737
      %1739 = vmatmul.f32.gmra.mxu0 %v1673
      %v1740 = vpop.f32.mrf.mxu0
      %v1741 = vadd.f32 0.0, %v1740
      %1742 = vmatmul.f32.gmra.mxu0 %v1676
      %v1743 = vpop.f32.mrf.mxu0
      %v1744 = vadd.f32 0.0, %v1743
      %1745 = vmatmul.f32.gmra.mxu0 %v1679
      %v1746 = vpop.f32.mrf.mxu0
      %v1747 = vadd.f32 0.0, %v1746
      %1748 = vmatmul.f32.gmra.mxu0 %v1682
      %v1749 = vpop.f32.mrf.mxu0
      %v1750 = vadd.f32 0.0, %v1749
      %1751 = vmatmul.f32.gmra.mxu0 %v1685
      %v1752 = vpop.f32.mrf.mxu0
      %v1753 = vadd.f32 0.0, %v1752
      %1754 = vmatmul.f32.gmra.mxu0 %v1688
      %v1755 = vpop.f32.mrf.mxu0
      %v1756 = vadd.f32 0.0, %v1755
      %1757 = vmatmul.f32.gmra.mxu0 %v1691
      %v1758 = vpop.f32.mrf.mxu0
      %v1759 = vadd.f32 0.0, %v1758
      %1760 = vmatmul.f32.gmra.mxu0 %v1694
      %v1761 = vpop.f32.mrf.mxu0
      %v1762 = vadd.f32 0.0, %v1761
      %1763 = vmatmul.f32.gmra.mxu0 %v1697
      %v1764 = vpop.f32.mrf.mxu0
      %v1765 = vadd.f32 0.0, %v1764
      %1766 = vmatmul.f32.gmra.mxu0 %v1700
      %v1767 = vpop.f32.mrf.mxu0
      %v1768 = vadd.f32 0.0, %v1767
      %1769 = vmatmul.f32.gmra.mxu0 %v1703
      %v1770 = vpop.f32.mrf.mxu0
      %v1771 = vadd.f32 0.0, %v1770
      %1772 = vmatmul.f32.gmra.mxu0 %v1706
      %v1773 = vpop.f32.mrf.mxu0
      %v1774 = vadd.f32 0.0, %v1773
      %1775 = vdwg.mxu0
      %v1776 = vadd.f32 %v1626, %v1729
      %v1777 = vadd.f32 %v1627, %v1732
      %v1778 = vadd.f32 %v1628, %v1735
      %v1779 = vadd.f32 %v1629, %v1738
      %v1780 = vadd.f32 %v1630, %v1741
      %v1781 = vadd.f32 %v1631, %v1744
      %v1782 = vadd.f32 %v1632, %v1747
      %v1783 = vadd.f32 %v1633, %v1750
      %v1784 = vadd.f32 %v1634, %v1753
      %v1785 = vadd.f32 %v1635, %v1756
      %v1786 = vadd.f32 %v1636, %v1759
      %v1787 = vadd.f32 %v1637, %v1762
      %v1788 = vadd.f32 %v1638, %v1765
      %v1789 = vadd.f32 %v1639, %v1768
      %v1790 = vadd.f32 %v1640, %v1771
      %v1791 = vadd.f32 %v1641, %v1774
      %v1792 = vld [vmem:[%s4] sm:$0x1]
      %v1794 = vperm.slane %v1792, 0
      %v1796 = vadd.f32 %v1776, %v1794
      %v1797 = vadd.f32 %v1777, %v1794
      %v1798 = vadd.f32 %v1778, %v1794
      %v1799 = vadd.f32 %v1779, %v1794
      %v1800 = vadd.f32 %v1780, %v1794
      %v1801 = vadd.f32 %v1781, %v1794
      %v1802 = vadd.f32 %v1782, %v1794
      %v1803 = vadd.f32 %v1783, %v1794
      %v1804 = vadd.f32 %v1784, %v1794
      %v1805 = vadd.f32 %v1785, %v1794
      %v1806 = vadd.f32 %v1786, %v1794
      %v1807 = vadd.f32 %v1787, %v1794
      %v1808 = vadd.f32 %v1788, %v1794
      %v1809 = vadd.f32 %v1789, %v1794
      %v1810 = vadd.f32 %v1790, %v1794
      %v1811 = vadd.f32 %v1791, %v1794
      %v1812 = vmax.f32 %v1796, 0.0
      %v1813 = vmax.f32 %v1797, 0.0
      %v1814 = vmax.f32 %v1798, 0.0
      %v1815 = vmax.f32 %v1799, 0.0
      %v1816 = vmax.f32 %v1800, 0.0
      %v1817 = vmax.f32 %v1801, 0.0
      %v1818 = vmax.f32 %v1802, 0.0
      %v1819 = vmax.f32 %v1803, 0.0
      %v1820 = vmax.f32 %v1804, 0.0
      %v1821 = vmax.f32 %v1805, 0.0
      %v1822 = vmax.f32 %v1806, 0.0
      %v1823 = vmax.f32 %v1807, 0.0
      %v1824 = vmax.f32 %v1808, 0.0
      %v1825 = vmax.f32 %v1809, 0.0
      %v1826 = vmax.f32 %v1810, 0.0
      %v1827 = vmax.f32 %v1811, 0.0
      %v1828 = vld [vmem:[%s346] sm:$0xff]
      %v1829 = vld [vmem:[%s346 + $0x8] sm:$0xff]
      %v1830 = vld [vmem:[%s346 + $0x10] sm:$0xff]
      %v1831 = vld [vmem:[%s346 + $0x18] sm:$0xff]
      %v1832 = vld [vmem:[%s346 + $0x20] sm:$0xff]
      %v1833 = vld [vmem:[%s346 + $0x28] sm:$0xff]
      %v1834 = vld [vmem:[%s346 + $0x30] sm:$0xff]
      %v1835 = vld [vmem:[%s346 + $0x38] sm:$0xff]
      %v1836 = vld [vmem:[%s346 + $0x40] sm:$0xff]
      %v1837 = vld [vmem:[%s346 + $0x48] sm:$0xff]
      %v1838 = vld [vmem:[%s346 + $0x50] sm:$0xff]
      %v1839 = vld [vmem:[%s346 + $0x58] sm:$0xff]
      %v1840 = vld [vmem:[%s346 + $0x60] sm:$0xff]
      %v1841 = vld [vmem:[%s346 + $0x68] sm:$0xff]
      %v1842 = vld [vmem:[%s346 + $0x70] sm:$0xff]
      %v1843 = vld [vmem:[%s346 + $0x78] sm:$0xff]
      %1844 = vst.msk [vmem:[%s391] sm:$0xff] %vm410, %v1828
      %1845 = vst.msk [vmem:[%s391 + $0x8] sm:$0xff] %vm410, %v1829
      %1846 = vst.msk [vmem:[%s391 + $0x10] sm:$0xff] %vm410, %v1830
      %1847 = vst.msk [vmem:[%s391 + $0x18] sm:$0xff] %vm410, %v1831
      %1848 = vst.msk [vmem:[%s391 + $0x20] sm:$0xff] %vm410, %v1832
      %1849 = vst.msk [vmem:[%s391 + $0x28] sm:$0xff] %vm410, %v1833
      %1850 = vst.msk [vmem:[%s391 + $0x30] sm:$0xff] %vm410, %v1834
      %1851 = vst.msk [vmem:[%s391 + $0x38] sm:$0xff] %vm410, %v1835
      %1852 = vst.msk [vmem:[%s391 + $0x40] sm:$0xff] %vm410, %v1836
      %1853 = vst.msk [vmem:[%s391 + $0x48] sm:$0xff] %vm410, %v1837
      %1854 = vst.msk [vmem:[%s391 + $0x50] sm:$0xff] %vm410, %v1838
      %1855 = vst.msk [vmem:[%s391 + $0x58] sm:$0xff] %vm410, %v1839
      %1856 = vst.msk [vmem:[%s391 + $0x60] sm:$0xff] %vm410, %v1840
      %1857 = vst.msk [vmem:[%s391 + $0x68] sm:$0xff] %vm410, %v1841
      %1858 = vst.msk [vmem:[%s391 + $0x70] sm:$0xff] %vm410, %v1842
      %1859 = vst.msk [vmem:[%s391 + $0x78] sm:$0xff] %vm410, %v1843
      %1876 = vrot.lane.b32.xlu0 %v1812, 4
      %v1877 = vpop.permute.xlu0 %1876
      %1878 = vrot.lane.b32.xlu0 %v1813, 4
      %v1879 = vpop.permute.xlu0 %1878
      %1880 = vrot.lane.b32.xlu0 %v1814, 4
      %v1881 = vpop.permute.xlu0 %1880
      %1882 = vrot.lane.b32.xlu0 %v1815, 4
      %v1883 = vpop.permute.xlu0 %1882
      %1884 = vrot.lane.b32.xlu0 %v1816, 4
      %v1885 = vpop.permute.xlu0 %1884
      %1886 = vrot.lane.b32.xlu0 %v1817, 4
      %v1887 = vpop.permute.xlu0 %1886
      %1888 = vrot.lane.b32.xlu0 %v1818, 4
      %v1889 = vpop.permute.xlu0 %1888
      %1890 = vrot.lane.b32.xlu0 %v1819, 4
      %v1891 = vpop.permute.xlu0 %1890
      %1892 = vrot.lane.b32.xlu0 %v1820, 4
      %v1893 = vpop.permute.xlu0 %1892
      %1894 = vrot.lane.b32.xlu0 %v1821, 4
      %v1895 = vpop.permute.xlu0 %1894
      %1896 = vrot.lane.b32.xlu0 %v1822, 4
      %v1897 = vpop.permute.xlu0 %1896
      %1898 = vrot.lane.b32.xlu0 %v1823, 4
      %v1899 = vpop.permute.xlu0 %1898
      %1900 = vrot.lane.b32.xlu0 %v1824, 4
      %v1901 = vpop.permute.xlu0 %1900
      %1902 = vrot.lane.b32.xlu0 %v1825, 4
      %v1903 = vpop.permute.xlu0 %1902
      %1904 = vrot.lane.b32.xlu0 %v1826, 4
      %v1905 = vpop.permute.xlu0 %1904
      %1906 = vrot.lane.b32.xlu0 %v1827, 4
      %v1907 = vpop.permute.xlu0 %1906
      %vm1924 = vcmask 97312
      %1925 = vst.msk [vmem:[%s391] sm:$0xff] %vm1924, %v1877
      %1926 = vst.msk [vmem:[%s391 + $0x8] sm:$0xff] %vm1924, %v1879
      %1927 = vst.msk [vmem:[%s391 + $0x10] sm:$0xff] %vm1924, %v1881
      %1928 = vst.msk [vmem:[%s391 + $0x18] sm:$0xff] %vm1924, %v1883
      %1929 = vst.msk [vmem:[%s391 + $0x20] sm:$0xff] %vm1924, %v1885
      %1930 = vst.msk [vmem:[%s391 + $0x28] sm:$0xff] %vm1924, %v1887
      %1931 = vst.msk [vmem:[%s391 + $0x30] sm:$0xff] %vm1924, %v1889
      %1932 = vst.msk [vmem:[%s391 + $0x38] sm:$0xff] %vm1924, %v1891
      %1933 = vst.msk [vmem:[%s391 + $0x40] sm:$0xff] %vm1924, %v1893
      %1934 = vst.msk [vmem:[%s391 + $0x48] sm:$0xff] %vm1924, %v1895
      %1935 = vst.msk [vmem:[%s391 + $0x50] sm:$0xff] %vm1924, %v1897
      %1936 = vst.msk [vmem:[%s391 + $0x58] sm:$0xff] %vm1924, %v1899
      %1937 = vst.msk [vmem:[%s391 + $0x60] sm:$0xff] %vm1924, %v1901
      %1938 = vst.msk [vmem:[%s391 + $0x68] sm:$0xff] %vm1924, %v1903
      %1939 = vst.msk [vmem:[%s391 + $0x70] sm:$0xff] %vm1924, %v1905
      %1940 = vst.msk [vmem:[%s391 + $0x78] sm:$0xff] %vm1924, %v1907
      %s1941 = smul.u32 8, %s21
      %p1942 = scmp.lt.s32.totalorder %s20, 1
      %s1943 = scalar_select %p1942, %s20, 1
      %p1944 = scmp.lt.s32.totalorder %s1941, 15
      %s1945 = scalar_select %p1944, %s1941, 15
      %s1946 = smul.addr %s1945, 2
      %s1947 = smul.addr %s1943, 32
      %s1948 = sadd.s32 %s1946, %s1947
      %s1949 = smul.addr %s1948, 8
      %s1950 = scalar_lea.vmem %s5, %s1949
      // Predicated region
      $region49: #{tpu_custom_call.1} parent=39 // pred_check
        %p1951 = pneg %p190
      $region50: #{tpu_custom_call.1} parent=39 // pred_check_branch
        %1953 = sbr.rel (%p1951) target = $region52
      $region51: #{tpu_custom_call.1} parent=39 // pred_region
        %s1954 = smul.u32 8, %s21
      $region52: #{tpu_custom_call.1} parent=39 // pred_fallthru
        _
    $region40: #{tpu_custom_call.1} parent=5 // pred_fallthru
      _
    %p1955 = scmp.le.s32.totalorder 2, %s11
    // Predicated region
    $region53: #{tpu_custom_call.1} parent=5 // pred_check
      %p1956 = pneg %p1955
    $region54: #{tpu_custom_call.1} parent=5 // pred_check_branch
      %1958 = sbr.rel (%p1956) target = $region56
    $region55: #{tpu_custom_call.1} parent=5 // pred_region
      %s1959 = ssub.s32 %s11, 2
      // Predicated region
      $region57: #{tpu_custom_call.1} parent=55 // pred_check
        %p1960 = pneg %p196
      $region58: #{tpu_custom_call.1} parent=55 // pred_check_branch
        %1962 = sbr.rel (%p1960) target = $region60
      $region59: #{tpu_custom_call.1} parent=55 // pred_region
        %s1963 = smul.u32 8, %s23
        %p1964 = scmp.lt.s32.totalorder %s22, 1
        %s1965 = scalar_select %p1964, %s22, 1
        %p1966 = scmp.lt.s32.totalorder %s1963, 15
        %s1967 = scalar_select %p1966, %s1963, 15
        %s1968 = smul.addr %s1967, 2
        %s1969 = smul.addr %s1965, 32
        %s1970 = sadd.s32 %s1968, %s1969
        %s1971 = smul.addr %s1970, 8
        %s1972 = scalar_lea.vmem %s5, %s1971
      $region60: #{tpu_custom_call.1} parent=55 // pred_fallthru
        _
    $region56: #{tpu_custom_call.1} parent=5 // pred_fallthru
      _
  $region6: #{tpu_custom_call.1} parent=0 // loop_footer
    %s15 = sadd.s32 1, %s11
  $region7: #{tpu_custom_call.1} parent=0 // loop_footer_branch
    %10 = sbr.rel target = $region3
  $region8: #{tpu_custom_call.1} parent=0 // loop_exit
    _

</llo_original>
